<compile_context>
chip_gen: v7x
topology: tpu7x:2x2x1
jax: 0.10.0
libtpu: 0.0.40
codegen_flags: <defaults>
</compile_context>

<pallas_src>
import functools

import jax
import jax.numpy as jnp
import numpy as np
from jax import lax
from jax.experimental import pallas as pl
from jax.experimental.pallas import tpu as pltpu


def _round_up(x, m):
    return (x + m - 1) // m * m


def _next_pow2(x):
    p = 1
    while p < x:
        p *= 2
    return p


def _pick_tile_sub(row_lanes, in_bytes, t_rows, budget_bytes):
    """Sublane tile size from a double-buffered VMEM budget.

    Per sublane of tile, the pipeline holds (double-buffered):
      3 embedding streams, `row_lanes` f-units of `in_bytes` each, plus the
      weight block (lane-padded to 128 f32 lanes).
    """
    per_sublane = 2 * (3 * row_lanes * in_bytes + 128 * 4)
    tile = budget_bytes // per_sublane
    # Keep >= 2 grid steps when the problem is big enough (v7x megacore).
    tile = min(tile, _round_up(max(1, -(-t_rows // 2)), 8))
    tile = max(8, (int(tile) // 8) * 8)
    return int(tile)


def _trimap_kernel(yi_ref, yj_ref, yk_ref, w_ref, loss_ref, viol_ref, *,
                   g, d_pad, t):
    """Per-tile triplet loss / violation partial sums.

    Block shapes:
      yi/yj/yk : (tile_sub, g*d_pad)  -- g triplets packed along lanes
      w        : (tile_sub, g)
      loss/viol: (1, 1, g)            -- per-tile partial sums (wrapper sums)
    """
    # Promote to f32 BEFORE the subtract (bf16 inputs would otherwise lose
    # precision in the small-distance cancellation).
    yi = yi_ref[...].astype(jnp.float32)
    yj = yj_ref[...].astype(jnp.float32)
    yk = yk_ref[...].astype(jnp.float32)

    sq_ij = jnp.square(yi - yj)                     # (tile_sub, g*d_pad)
    sq_ik = jnp.square(yi - yk)

    # Segment-sum each group of d_pad lanes into one per-triplet distance via
    # a constant 0/1 matrix on the otherwise-idle MXU (memory-bound kernel,
    # so the extra matmul passes are free).
    row = g * d_pad
    lane = lax.broadcasted_iota(jnp.int32, (row, g), 0)
    seg = lax.broadcasted_iota(jnp.int32, (row, g), 1)
    seg_mat = ((lane >= seg * d_pad) & (lane < (seg + 1) * d_pad)).astype(
        jnp.float32)                                # (row, g)

    d_ij = 1.0 + jnp.dot(sq_ij, seg_mat, preferred_element_type=jnp.float32,
                         precision=lax.Precision.HIGHEST)   # (tile_sub, g)
    d_ik = 1.0 + jnp.dot(sq_ik, seg_mat, preferred_element_type=jnp.float32,
                         precision=lax.Precision.HIGHEST)

    # Padded triplets are (0, 0, 0): d_ij == d_ik == 1, so strict '>' is
    # false and (with weight 0) they contribute nothing.
    viol = (d_ij > d_ik).astype(jnp.float32)

    if t == 2:
        # 1 - 1/(1+r) with r = d_ij/d_ik  ==  d_ij / (d_ij + d_ik)
        log_t = d_ij / (d_ij + d_ik)
    elif float(t) == int(t) and int(t) >= 1:
        log_t = 1.0 - lax.integer_pow(d_ik / (d_ij + d_ik), int(t) - 1)
    else:
        log_t = 1.0 - (d_ik / (d_ij + d_ik)) ** (t - 1)

    w = w_ref[...].astype(jnp.float32)              # (tile_sub, g)

    # In-kernel partial reduction: one small lane-dense block per tile.
    loss_ref[...] = jnp.sum(w * log_t, axis=0, keepdims=True)[None]   # (1,1,g)
    viol_ref[...] = jnp.sum(viol, axis=0, keepdims=True)[None]        # (1,1,g)


def trimapper_forward(Y, triplets, weights, *, t=2, compute_dtype=None,
                      vmem_block_budget_bytes=24 << 20):
    """Replicates TriMapper.forward(): returns (loss, num_viol) scalars."""
    n, D = Y.shape
    T = triplets.shape[0]

    if compute_dtype is not None:
        Y = Y.astype(compute_dtype)       # cast once; halves gather + kernel HBM
    in_bytes = jnp.dtype(Y.dtype).itemsize

    # Lane packing: g triplets of d_pad lanes each per 128-lane row.
    if D <= 128:
        d_pad = min(128, _next_pow2(max(D, 1)))
        g = 128 // d_pad
    else:
        d_pad = _round_up(D, 128)
        g = 1
    row = g * d_pad

    t_rows_raw = -(-T // g)
    tile_sub = _pick_tile_sub(row, in_bytes, t_rows_raw, vmem_block_budget_bytes)
    t_rows = _round_up(t_rows_raw, tile_sub)
    num_tiles = t_rows // tile_sub
    Tp = t_rows * g
    pad_T = Tp - T

    # --- XLA glue: row-order embedding gather (contiguous D-element rows). ---
    # Padded triplets use row 0 with weight 0 (zero loss / zero violations,
    # relies on zero-fill padding and the strict '>' above).
    Yp = jnp.pad(Y, ((0, 0), (0, d_pad - D))) if d_pad != D else Y
    idx = triplets.astype(jnp.int32)
    w = weights.astype(jnp.float32)
    if pad_T:
        idx = jnp.pad(idx, ((0, pad_T), (0, 0)))
        w = jnp.pad(w, (0, pad_T))

    yi = jnp.take(Yp, idx[:, 0], axis=0).reshape(t_rows, row)
    yj = jnp.take(Yp, idx[:, 1], axis=0).reshape(t_rows, row)
    yk = jnp.take(Yp, idx[:, 2], axis=0).reshape(t_rows, row)
    w2 = w.reshape(t_rows, g)

    y_spec = pl.BlockSpec((tile_sub, row), lambda i: (i, 0))
    w_spec = pl.BlockSpec((tile_sub, g), lambda i: (i, 0))
    out_spec = pl.BlockSpec((1, 1, g), lambda i: (i, 0, 0))
    out_shape = jax.ShapeDtypeStruct((num_tiles, 1, g), jnp.float32)

    # Double-buffered block footprint (+ margin); keep under v7x's 64 MiB
    # physical VMEM, above v5e's 16 MiB default scoped limit.
    footprint = 2 * tile_sub * (3 * row * in_bytes + 128 * 4)
    vmem_limit = int(min(48 << 20, max(32 << 20, footprint + (4 << 20))))

    loss_part, viol_part = pl.pallas_call(
        functools.partial(_trimap_kernel, g=g, d_pad=d_pad, t=t),
        out_shape=(out_shape, out_shape),
        grid_spec=pltpu.PrefetchScalarGridSpec(
            num_scalar_prefetch=0,
            grid=(num_tiles,),
            in_specs=[y_spec, y_spec, y_spec, w_spec],
            out_specs=(out_spec, out_spec),
        ),
        compiler_params=pltpu.CompilerParams(
            dimension_semantics=("parallel",),
            vmem_limit_bytes=vmem_limit),
    )(yi, yj, yk, w2)

    # Tiny final reductions over the per-tile partials.
    return jnp.sum(loss_part), jnp.sum(viol_part)


def trimapper_reference(Y, triplets, weights, t=2):
    """Pure-numpy reference mirroring the PyTorch forward."""
    Y = np.asarray(Y, np.float32)
    tr = np.asarray(triplets)
    w = np.asarray(weights, np.float32)
    y_ij = Y[tr[:, 0]] - Y[tr[:, 1]]
    y_ik = Y[tr[:, 0]] - Y[tr[:, 2]]
    d_ij = 1.0 + np.sum(y_ij ** 2, -1)
    d_ik = 1.0 + np.sum(y_ik ** 2, -1)
    num_viol = np.sum((d_ij > d_ik).astype(np.float32))
    ratio = d_ij / d_ik
    log_t = 1.0 - 1.0 / (1.0 + ratio) ** (t - 1)
    return float(np.dot(w, log_t)), float(num_viol)


if __name__ == "__main__":
    # Small, deterministic synthetic problem consistent with __init__:
    #   out_shape = (n, num_dims), triplets (T, 3), weights (T,)
    n, num_dims, T, t = 32, 8, 16, 2

    key = jax.random.PRNGKey(0)
    k_embed, k_trip, k_w = jax.random.split(key, 3)

    embed_init = jax.random.normal(k_embed, (n, num_dims), jnp.float32) * 0.1
    triplets = jax.random.randint(k_trip, (T, 3), 0, n, jnp.int32)
    weights = jax.random.uniform(k_w, (T,), jnp.float32) + 0.5

    # f32 path: strict check against the numpy reference.
    fwd = jax.jit(functools.partial(trimapper_forward, t=t))
    loss, num_viol = fwd(embed_init, triplets, weights)
    jax.block_until_ready((loss, num_viol))

    ref_loss, ref_viol = trimapper_reference(embed_init, triplets, weights, t=t)
    assert np.allclose(float(loss), ref_loss, rtol=1e-4, atol=1e-5), (
        float(loss), ref_loss)
    assert float(num_viol) == ref_viol, (float(num_viol), ref_viol)

    # bf16-input path (v6e/v7x bandwidth optimization): compare against a
    # reference computed from the same bf16-rounded embeddings.
    fwd_bf16 = jax.jit(functools.partial(
        trimapper_forward, t=t, compute_dtype=jnp.bfloat16))
    loss_b, viol_b = fwd_bf16(embed_init, triplets, weights)
    jax.block_until_ready((loss_b, viol_b))

    embed_bf = np.asarray(embed_init.astype(jnp.bfloat16).astype(jnp.float32))
    ref_loss_b, ref_viol_b = trimapper_reference(embed_bf, triplets, weights, t=t)
    assert np.allclose(float(loss_b), ref_loss_b, rtol=1e-3, atol=1e-4), (
        float(loss_b), ref_loss_b)
    assert float(viol_b) == ref_viol_b, (float(viol_b), ref_viol_b)

    print("KERNEL_OK")
</pallas_src>

<mosaic_0001>
module attributes {stable_mosaic.version = 11 : i64} {
  func.func @_trimap_kernel(%arg0: i32, %arg1: memref<8x128xf32, #tpu.memory_space<vmem>>, %arg2: memref<8x128xf32, #tpu.memory_space<vmem>>, %arg3: memref<8x128xf32, #tpu.memory_space<vmem>>, %arg4: memref<8x16xf32, #tpu.memory_space<vmem>>, %arg5: memref<1x1x16xf32, #tpu.memory_space<vmem>>, %arg6: memref<1x1x16xf32, #tpu.memory_space<vmem>>) attributes {dimension_semantics = [#tpu.dimension_semantics<parallel>], iteration_bounds = array<i64: 1>, scalar_prefetch = 0 : i64, scratch_operands = 0 : i64, tpu.core_type = #tpu.core_type<tc>, window_params = [{transform_indices = @transform_0, window_bounds = array<i64: 8, 128>}, {transform_indices = @transform_1, window_bounds = array<i64: 8, 128>}, {transform_indices = @transform_2, window_bounds = array<i64: 8, 128>}, {transform_indices = @transform_3, window_bounds = array<i64: 8, 16>}, {transform_indices = @transform_4, window_bounds = array<i64: 1, 1, 16>}, {transform_indices = @transform_5, window_bounds = array<i64: 1, 1, 16>}]} {
    %c0 = arith.constant 0 : index
    %c0_0 = arith.constant 0 : index
    %0 = vector.load %arg1[%c0, %c0_0] : memref<8x128xf32, #tpu.memory_space<vmem>>, vector<8x128xf32>
    %c0_1 = arith.constant 0 : index
    %c0_2 = arith.constant 0 : index
    %1 = vector.load %arg2[%c0_1, %c0_2] : memref<8x128xf32, #tpu.memory_space<vmem>>, vector<8x128xf32>
    %c0_3 = arith.constant 0 : index
    %c0_4 = arith.constant 0 : index
    %2 = vector.load %arg3[%c0_3, %c0_4] : memref<8x128xf32, #tpu.memory_space<vmem>>, vector<8x128xf32>
    %3 = arith.subf %0, %1 : vector<8x128xf32>
    %4 = arith.mulf %3, %3 : vector<8x128xf32>
    %5 = arith.subf %0, %2 : vector<8x128xf32>
    %6 = arith.mulf %5, %5 : vector<8x128xf32>
    %7 = tpu.iota {dimensions = array<i32: 0>} : vector<128x16xi32>
    %8 = tpu.iota {dimensions = array<i32: 1>} : vector<128x16xi32>
    %c8_i32 = arith.constant 8 : i32
    %9 = vector.broadcast %c8_i32 : i32 to vector<128x16xi32>
    %10 = arith.muli %8, %9 : vector<128x16xi32>
    %11 = arith.cmpi sge, %7, %10 : vector<128x16xi32>
    %c1_i32 = arith.constant 1 : i32
    %12 = vector.broadcast %c1_i32 : i32 to vector<128x16xi32>
    %13 = arith.addi %8, %12 : vector<128x16xi32>
    %c8_i32_5 = arith.constant 8 : i32
    %14 = vector.broadcast %c8_i32_5 : i32 to vector<128x16xi32>
    %15 = arith.muli %13, %14 : vector<128x16xi32>
    %16 = arith.cmpi slt, %7, %15 : vector<128x16xi32>
    %17 = arith.andi %11, %16 : vector<128x16xi1>
    %18 = arith.extui %17 : vector<128x16xi1> to vector<128x16xi32>
    %19 = arith.sitofp %18 : vector<128x16xi32> to vector<128x16xf32>
    %cst = arith.constant dense<0.000000e+00> : vector<8x16xf32>
    %20 = tpu.matmul %4, %19, %cst {dimension_numbers = #tpu.dot_dimension_numbers<[1], [0], [0], [1], [0, 0, 1, 1], [], []>, precision = #tpu.contract_precision<fp32>} : vector<8x128xf32>, vector<128x16xf32>, vector<8x16xf32> -> vector<8x16xf32>
    %cst_6 = arith.constant 1.000000e+00 : f32
    %21 = vector.broadcast %cst_6 : f32 to vector<8x16xf32>
    %22 = arith.addf %21, %20 : vector<8x16xf32>
    %cst_7 = arith.constant dense<0.000000e+00> : vector<8x16xf32>
    %23 = tpu.matmul %6, %19, %cst_7 {dimension_numbers = #tpu.dot_dimension_numbers<[1], [0], [0], [1], [0, 0, 1, 1], [], []>, precision = #tpu.contract_precision<fp32>} : vector<8x128xf32>, vector<128x16xf32>, vector<8x16xf32> -> vector<8x16xf32>
    %cst_8 = arith.constant 1.000000e+00 : f32
    %24 = vector.broadcast %cst_8 : f32 to vector<8x16xf32>
    %25 = arith.addf %24, %23 : vector<8x16xf32>
    %26 = arith.cmpf ogt, %22, %25 : vector<8x16xf32>
    %27 = arith.extui %26 : vector<8x16xi1> to vector<8x16xi32>
    %28 = arith.sitofp %27 : vector<8x16xi32> to vector<8x16xf32>
    %29 = arith.addf %22, %25 : vector<8x16xf32>
    %30 = arith.divf %22, %29 : vector<8x16xf32>
    %c0_9 = arith.constant 0 : index
    %c0_10 = arith.constant 0 : index
    %31 = vector.load %arg4[%c0_9, %c0_10] : memref<8x16xf32, #tpu.memory_space<vmem>>, vector<8x16xf32>
    %32 = arith.mulf %31, %30 : vector<8x16xf32>
    %cst_11 = arith.constant dense<0.000000e+00> : vector<16xf32>
    %33 = vector.multi_reduction <add>, %32, %cst_11 [0] : vector<8x16xf32> to vector<16xf32>
    %34 = vector.shape_cast %33 : vector<16xf32> to vector<1x16xf32>
    %35 = vector.shape_cast %34 : vector<1x16xf32> to vector<1x1x16xf32>
    %c0_12 = arith.constant 0 : index
    %c0_13 = arith.constant 0 : index
    %c0_14 = arith.constant 0 : index
    %36 = vector.load %arg5[%c0_12, %c0_13, %c0_14] : memref<1x1x16xf32, #tpu.memory_space<vmem>>, vector<1x1x16xf32>
    tpu.vector_store %arg5[%c0_12, %c0_13, %c0_14], %35 {strides = array<i32>} : memref<1x1x16xf32, #tpu.memory_space<vmem>>, vector<1x1x16xf32>,
    %cst_15 = arith.constant dense<0.000000e+00> : vector<16xf32>
    %37 = vector.multi_reduction <add>, %28, %cst_15 [0] : vector<8x16xf32> to vector<16xf32>
    %38 = vector.shape_cast %37 : vector<16xf32> to vector<1x16xf32>
    %39 = vector.shape_cast %38 : vector<1x16xf32> to vector<1x1x16xf32>
    %c0_16 = arith.constant 0 : index
    %c0_17 = arith.constant 0 : index
    %c0_18 = arith.constant 0 : index
    %40 = vector.load %arg6[%c0_16, %c0_17, %c0_18] : memref<1x1x16xf32, #tpu.memory_space<vmem>>, vector<1x1x16xf32>
    tpu.vector_store %arg6[%c0_16, %c0_17, %c0_18], %39 {strides = array<i32>} : memref<1x1x16xf32, #tpu.memory_space<vmem>>, vector<1x1x16xf32>,
    return
  }
  func.func @transform_0(%arg0: i32) -> (i32, i32) {
    %c0_i32 = arith.constant 0 : i32
    %c0_i32_0 = arith.constant 0 : i32
    return %arg0, %c0_i32 : i32, i32
  }
  func.func @transform_1(%arg0: i32) -> (i32, i32) {
    %c0_i32 = arith.constant 0 : i32
    %c0_i32_0 = arith.constant 0 : i32
    return %arg0, %c0_i32 : i32, i32
  }
  func.func @transform_2(%arg0: i32) -> (i32, i32) {
    %c0_i32 = arith.constant 0 : i32
    %c0_i32_0 = arith.constant 0 : i32
    return %arg0, %c0_i32 : i32, i32
  }
  func.func @transform_3(%arg0: i32) -> (i32, i32) {
    %c0_i32 = arith.constant 0 : i32
    %c0_i32_0 = arith.constant 0 : i32
    return %arg0, %c0_i32 : i32, i32
  }
  func.func @transform_4(%arg0: i32) -> (i32, i32, i32) {
    %c0_i32 = arith.constant 0 : i32
    %c0_i32_0 = arith.constant 0 : i32
    %c0_i32_1 = arith.constant 0 : i32
    return %arg0, %c0_i32, %c0_i32_0 : i32, i32, i32
  }
  func.func @transform_5(%arg0: i32) -> (i32, i32, i32) {
    %c0_i32 = arith.constant 0 : i32
    %c0_i32_0 = arith.constant 0 : i32
    %c0_i32_1 = arith.constant 0 : i32
    return %arg0, %c0_i32, %c0_i32_0 : i32, i32, i32
  }
}

</mosaic_0001>

<llo_original>
// kernel: trimapper_forward.1
$region0: #{trimapper_forward.1}
  #allocation0 [shape = 'u32[]', space=smem, size = 0x4, offset = 0x4, fixed_abs, tag = 'smem constant byte address 0x4 - core index']
  #allocation1 [shape = 'u32[144,128]{1,0:T(1,128)}', space=vmem, size = 0x12000, scoped, tag = 'internal scratch']
  %s0 = inlined_call_operand.vmem [shape: f32[8,128], index: 0, kind: input, shape index: {}]
  %s1 = inlined_call_operand.vmem [shape: f32[8,128], index: 1, kind: input, shape index: {}]
  %s2 = inlined_call_operand.vmem [shape: f32[8,128], index: 2, kind: input, shape index: {}]
  %s3 = inlined_call_operand.vmem [shape: f32[8,16], index: 3, kind: input, shape index: {}]
  %s4 = inlined_call_operand.vmem [shape: f32[1,1,16], index: 4, kind: output, shape index: {0}]
  %s5 = inlined_call_operand.vmem [shape: f32[1,1,16], index: 5, kind: output, shape index: {1}]
  %6 = xla_tuple %s4, %s5
  %s7 = sld [smem:[#allocation0]]
  $region34: #{trimapper_forward.1} parent=0
    _
  %s9 = ssub.s32 1, %s7
  %s10 = scalar_select 0, %s9, %s7
  // Predicated region
  $region2: #{trimapper_forward.1} parent=0 // pred_check
    _
  $region3: #{trimapper_forward.1} parent=0 // pred_check_branch
    %12 = sbr.rel (0) target = $region5
  $region4: #{trimapper_forward.1} parent=0 // pred_region
    _
  $region5: #{trimapper_forward.1} parent=0 // pred_fallthru
    _
  // Predicated region
  $region6: #{trimapper_forward.1} parent=0 // pred_check
    _
  $region7: #{trimapper_forward.1} parent=0 // pred_check_branch
    %14 = sbr.rel (0) target = $region9
  $region8: #{trimapper_forward.1} parent=0 // pred_region
    _
  $region9: #{trimapper_forward.1} parent=0 // pred_fallthru
    _
  // Predicated region
  $region10: #{trimapper_forward.1} parent=0 // pred_check
    _
  $region11: #{trimapper_forward.1} parent=0 // pred_check_branch
    %16 = sbr.rel (0) target = $region13
  $region12: #{trimapper_forward.1} parent=0 // pred_region
    _
  $region13: #{trimapper_forward.1} parent=0 // pred_fallthru
    _
  // Predicated region
  $region14: #{trimapper_forward.1} parent=0 // pred_check
    _
  $region15: #{trimapper_forward.1} parent=0 // pred_check_branch
    %18 = sbr.rel (0) target = $region17
  $region16: #{trimapper_forward.1} parent=0 // pred_region
    _
  $region17: #{trimapper_forward.1} parent=0 // pred_fallthru
    _
  %v19 = vld [vmem:[%s0] sm:$0xff]
  %v20 = vld [vmem:[%s1] sm:$0xff]
  %v21 = vld [vmem:[%s2] sm:$0xff]
  %v22 = vsub.f32 %v19, %v20
  %v23 = vmul.f32 %v22, %v22
  %v24 = vsub.f32 %v19, %v21
  %v25 = vmul.f32 %v24, %v24
  %v26 = vlaneseq
  %v27 = vshrl.u32 %v26, 7
  %v28 = vadd.s32 %v27, 8
  %v29 = vadd.s32 %v27, 16
  %v30 = vadd.s32 %v27, 24
  %v31 = vadd.s32 %v27, 32
  %v32 = vadd.s32 %v27, 40
  %v33 = vadd.s32 %v27, 48
  %v34 = vadd.s32 %v27, 56
  %v35 = vadd.s32 %v27, 64
  %v36 = vadd.s32 %v27, 72
  %v37 = vadd.s32 %v27, 80
  %v38 = vadd.s32 %v27, 88
  %v39 = vadd.s32 %v27, 96
  %v40 = vadd.s32 %v27, 104
  %v41 = vadd.s32 %v27, 112
  %v42 = vadd.s32 %v27, 120
  %v43 = vlaneseq
  %v44 = vand.u32 %v43, 127
  %v45 = vmul.u32 %v44, 8
  %vm46 = vcmp.ge.s32.totalorder %v27, %v45
  %vm47 = vcmp.ge.s32.totalorder %v28, %v45
  %vm48 = vcmp.ge.s32.totalorder %v29, %v45
  %vm49 = vcmp.ge.s32.totalorder %v30, %v45
  %vm50 = vcmp.ge.s32.totalorder %v31, %v45
  %vm51 = vcmp.ge.s32.totalorder %v32, %v45
  %vm52 = vcmp.ge.s32.totalorder %v33, %v45
  %vm53 = vcmp.ge.s32.totalorder %v34, %v45
  %vm54 = vcmp.ge.s32.totalorder %v35, %v45
  %vm55 = vcmp.ge.s32.totalorder %v36, %v45
  %vm56 = vcmp.ge.s32.totalorder %v37, %v45
  %vm57 = vcmp.ge.s32.totalorder %v38, %v45
  %vm58 = vcmp.ge.s32.totalorder %v39, %v45
  %vm59 = vcmp.ge.s32.totalorder %v40, %v45
  %vm60 = vcmp.ge.s32.totalorder %v41, %v45
  %vm61 = vcmp.ge.s32.totalorder %v42, %v45
  %v62 = vadd.s32 %v44, 1
  %v63 = vmul.u32 %v62, 8
  %vm64 = vcmp.lt.s32.totalorder %v27, %v63
  %vm65 = vcmp.lt.s32.totalorder %v28, %v63
  %vm66 = vcmp.lt.s32.totalorder %v29, %v63
  %vm67 = vcmp.lt.s32.totalorder %v30, %v63
  %vm68 = vcmp.lt.s32.totalorder %v31, %v63
  %vm69 = vcmp.lt.s32.totalorder %v32, %v63
  %vm70 = vcmp.lt.s32.totalorder %v33, %v63
  %vm71 = vcmp.lt.s32.totalorder %v34, %v63
  %vm72 = vcmp.lt.s32.totalorder %v35, %v63
  %vm73 = vcmp.lt.s32.totalorder %v36, %v63
  %vm74 = vcmp.lt.s32.totalorder %v37, %v63
  %vm75 = vcmp.lt.s32.totalorder %v38, %v63
  %vm76 = vcmp.lt.s32.totalorder %v39, %v63
  %vm77 = vcmp.lt.s32.totalorder %v40, %v63
  %vm78 = vcmp.lt.s32.totalorder %v41, %v63
  %vm79 = vcmp.lt.s32.totalorder %v42, %v63
  %vm80 = vmand %vm46, %vm64
  %vm81 = vmand %vm47, %vm65
  %vm82 = vmand %vm48, %vm66
  %vm83 = vmand %vm49, %vm67
  %vm84 = vmand %vm50, %vm68
  %vm85 = vmand %vm51, %vm69
  %vm86 = vmand %vm52, %vm70
  %vm87 = vmand %vm53, %vm71
  %vm88 = vmand %vm54, %vm72
  %vm89 = vmand %vm55, %vm73
  %vm90 = vmand %vm56, %vm74
  %vm91 = vmand %vm57, %vm75
  %vm92 = vmand %vm58, %vm76
  %vm93 = vmand %vm59, %vm77
  %vm94 = vmand %vm60, %vm78
  %vm95 = vmand %vm61, %vm79
  %v96 = vsel %vm80, 1, 0
  %v97 = vsel %vm81, 1, 0
  %v98 = vsel %vm82, 1, 0
  %v99 = vsel %vm83, 1, 0
  %v100 = vsel %vm84, 1, 0
  %v101 = vsel %vm85, 1, 0
  %v102 = vsel %vm86, 1, 0
  %v103 = vsel %vm87, 1, 0
  %v104 = vsel %vm88, 1, 0
  %v105 = vsel %vm89, 1, 0
  %v106 = vsel %vm90, 1, 0
  %v107 = vsel %vm91, 1, 0
  %v108 = vsel %vm92, 1, 0
  %v109 = vsel %vm93, 1, 0
  %v110 = vsel %vm94, 1, 0
  %v111 = vsel %vm95, 1, 0
  %v112 = vcvt.s32.f32 %v96
  %v113 = vcvt.s32.f32 %v97
  %v114 = vcvt.s32.f32 %v98
  %v115 = vcvt.s32.f32 %v99
  %v116 = vcvt.s32.f32 %v100
  %v117 = vcvt.s32.f32 %v101
  %v118 = vcvt.s32.f32 %v102
  %v119 = vcvt.s32.f32 %v103
  %v120 = vcvt.s32.f32 %v104
  %v121 = vcvt.s32.f32 %v105
  %v122 = vcvt.s32.f32 %v106
  %v123 = vcvt.s32.f32 %v107
  %v124 = vcvt.s32.f32 %v108
  %v125 = vcvt.s32.f32 %v109
  %v126 = vcvt.s32.f32 %v110
  %v127 = vcvt.s32.f32 %v111
  %128 = vmatprep.subr.mxu0 0.0
  %v129 = vand.u32 %v112, 4294901760
  %130 = vmatpush1.msra.mxu0 %v129
  %131 = vmatprep.subr.mxu0 0.0
  %v132 = vand.u32 %v113, 4294901760
  %133 = vmatpush1.msra.mxu0 %v132
  %134 = vmatprep.subr.mxu0 0.0
  %v135 = vand.u32 %v114, 4294901760
  %136 = vmatpush1.msra.mxu0 %v135
  %137 = vmatprep.subr.mxu0 0.0
  %v138 = vand.u32 %v115, 4294901760
  %139 = vmatpush1.msra.mxu0 %v138
  %140 = vmatprep.subr.mxu0 0.0
  %v141 = vand.u32 %v116, 4294901760
  %142 = vmatpush1.msra.mxu0 %v141
  %143 = vmatprep.subr.mxu0 0.0
  %v144 = vand.u32 %v117, 4294901760
  %145 = vmatpush1.msra.mxu0 %v144
  %146 = vmatprep.subr.mxu0 0.0
  %v147 = vand.u32 %v118, 4294901760
  %148 = vmatpush1.msra.mxu0 %v147
  %149 = vmatprep.subr.mxu0 0.0
  %v150 = vand.u32 %v119, 4294901760
  %151 = vmatpush1.msra.mxu0 %v150
  %152 = vmatprep.subr.mxu0 0.0
  %v153 = vand.u32 %v120, 4294901760
  %154 = vmatpush1.msra.mxu0 %v153
  %155 = vmatprep.subr.mxu0 0.0
  %v156 = vand.u32 %v121, 4294901760
  %157 = vmatpush1.msra.mxu0 %v156
  %158 = vmatprep.subr.mxu0 0.0
  %v159 = vand.u32 %v122, 4294901760
  %160 = vmatpush1.msra.mxu0 %v159
  %161 = vmatprep.subr.mxu0 0.0
  %v162 = vand.u32 %v123, 4294901760
  %163 = vmatpush1.msra.mxu0 %v162
  %164 = vmatprep.subr.mxu0 0.0
  %v165 = vand.u32 %v124, 4294901760
  %166 = vmatpush1.msra.mxu0 %v165
  %167 = vmatprep.subr.mxu0 0.0
  %v168 = vand.u32 %v125, 4294901760
  %169 = vmatpush1.msra.mxu0 %v168
  %170 = vmatprep.subr.mxu0 0.0
  %v171 = vand.u32 %v126, 4294901760
  %172 = vmatpush1.msra.mxu0 %v171
  %173 = vmatprep.subr.mxu0 0.0
  %v174 = vand.u32 %v127, 4294901760
  %175 = vmatpush1.msra.mxu0 %v174
  %176 = vmatprep.subr.mxu0 0.0
  %177 = vmatpush1.msra.mxu0 0.0
  %178 = vmatprep.subr.mxu0 0.0
  %179 = vmatpush1.msra.mxu0 0.0
  %180 = vmatprep.subr.mxu0 0.0
  %181 = vmatpush1.msra.mxu0 0.0
  %182 = vmatprep.subr.mxu0 0.0
  %183 = vmatpush1.msra.mxu0 0.0
  %184 = vmatprep.subr.mxu0 0.0
  %185 = vmatpush1.msra.mxu0 0.0
  %186 = vmatprep.subr.mxu0 0.0
  %187 = vmatpush1.msra.mxu0 0.0
  %188 = vmatprep.subr.mxu0 0.0
  %189 = vmatpush1.msra.mxu0 0.0
  %190 = vmatprep.subr.mxu0 0.0
  %191 = vmatpush1.msra.mxu0 0.0
  %192 = vmatprep.subr.mxu0 0.0
  %193 = vmatpush1.msra.mxu0 0.0
  %194 = vmatprep.subr.mxu0 0.0
  %195 = vmatpush1.msra.mxu0 0.0
  %196 = vmatprep.subr.mxu0 0.0
  %197 = vmatpush1.msra.mxu0 0.0
  %198 = vmatprep.subr.mxu0 0.0
  %199 = vmatpush1.msra.mxu0 0.0
  %200 = vmatprep.subr.mxu0 0.0
  %201 = vmatpush1.msra.mxu0 0.0
  %202 = vmatprep.subr.mxu0 0.0
  %203 = vmatpush1.msra.mxu0 0.0
  %204 = vmatprep.subr.mxu0 0.0
  %205 = vmatpush1.msra.mxu0 0.0
  %206 = vmatprep.subr.mxu0 0.0
  %207 = vmatpush1.msra.mxu0 0.0
  %208 = vmatprep.mubr.f32.mxu0 0.0
  %v209 = vand.u32 %v23, 4294901760
  %v210 = vsub.f32 %v23, %v209
  %v211 = vand.u32 %v210, 4294901760
  %v212 = vsub.f32 %v210, %v211
  %v213 = vand.u32 %v212, 4294901760
  %214 = vmatmul.mubr.f32.gmra.mrb[0].mxu0 %v213
  %v215 = vpop.f32.mrb[0].mxu0
  %v216 = vadd.f32 1.0, %v215
  %v217 = vpop.f32.mrb[0].mxu0
  %218 = vdwg.mxu0
  %219 = vmatprep.subr.mxu0 0.0
  %v220 = vand.u32 %v112, 4294901760
  %v221 = vsub.f32 %v112, %v220
  %v222 = vand.u32 %v221, 4294901760
  %v223 = vsub.f32 %v221, %v222
  %v224 = vand.u32 %v223, 4294901760
  %225 = vmatpush1.msra.mxu0 %v224
  %226 = vmatprep.subr.mxu0 0.0
  %v227 = vand.u32 %v113, 4294901760
  %v228 = vsub.f32 %v113, %v227
  %v229 = vand.u32 %v228, 4294901760
  %v230 = vsub.f32 %v228, %v229
  %v231 = vand.u32 %v230, 4294901760
  %232 = vmatpush1.msra.mxu0 %v231
  %233 = vmatprep.subr.mxu0 0.0
  %v234 = vand.u32 %v114, 4294901760
  %v235 = vsub.f32 %v114, %v234
  %v236 = vand.u32 %v235, 4294901760
  %v237 = vsub.f32 %v235, %v236
  %v238 = vand.u32 %v237, 4294901760
  %239 = vmatpush1.msra.mxu0 %v238
  %240 = vmatprep.subr.mxu0 0.0
  %v241 = vand.u32 %v115, 4294901760
  %v242 = vsub.f32 %v115, %v241
  %v243 = vand.u32 %v242, 4294901760
  %v244 = vsub.f32 %v242, %v243
  %v245 = vand.u32 %v244, 4294901760
  %246 = vmatpush1.msra.mxu0 %v245
  %247 = vmatprep.subr.mxu0 0.0
  %v248 = vand.u32 %v116, 4294901760
  %v249 = vsub.f32 %v116, %v248
  %v250 = vand.u32 %v249, 4294901760
  %v251 = vsub.f32 %v249, %v250
  %v252 = vand.u32 %v251, 4294901760
  %253 = vmatpush1.msra.mxu0 %v252
  %254 = vmatprep.subr.mxu0 0.0
  %v255 = vand.u32 %v117, 4294901760
  %v256 = vsub.f32 %v117, %v255
  %v257 = vand.u32 %v256, 4294901760
  %v258 = vsub.f32 %v256, %v257
  %v259 = vand.u32 %v258, 4294901760
  %260 = vmatpush1.msra.mxu0 %v259
  %261 = vmatprep.subr.mxu0 0.0
  %v262 = vand.u32 %v118, 4294901760
  %v263 = vsub.f32 %v118, %v262
  %v264 = vand.u32 %v263, 4294901760
  %v265 = vsub.f32 %v263, %v264
  %v266 = vand.u32 %v265, 4294901760
  %267 = vmatpush1.msra.mxu0 %v266
  %268 = vmatprep.subr.mxu0 0.0
  %v269 = vand.u32 %v119, 4294901760
  %v270 = vsub.f32 %v119, %v269
  %v271 = vand.u32 %v270, 4294901760
  %v272 = vsub.f32 %v270, %v271
  %v273 = vand.u32 %v272, 4294901760
  %274 = vmatpush1.msra.mxu0 %v273
  %275 = vmatprep.subr.mxu0 0.0
  %v276 = vand.u32 %v120, 4294901760
  %v277 = vsub.f32 %v120, %v276
  %v278 = vand.u32 %v277, 4294901760
  %v279 = vsub.f32 %v277, %v278
  %v280 = vand.u32 %v279, 4294901760
  %281 = vmatpush1.msra.mxu0 %v280
  %282 = vmatprep.subr.mxu0 0.0
  %v283 = vand.u32 %v121, 4294901760
  %v284 = vsub.f32 %v121, %v283
  %v285 = vand.u32 %v284, 4294901760
  %v286 = vsub.f32 %v284, %v285
  %v287 = vand.u32 %v286, 4294901760
  %288 = vmatpush1.msra.mxu0 %v287
  %289 = vmatprep.subr.mxu0 0.0
  %v290 = vand.u32 %v122, 4294901760
  %v291 = vsub.f32 %v122, %v290
  %v292 = vand.u32 %v291, 4294901760
  %v293 = vsub.f32 %v291, %v292
  %v294 = vand.u32 %v293, 4294901760
  %295 = vmatpush1.msra.mxu0 %v294
  %296 = vmatprep.subr.mxu0 0.0
  %v297 = vand.u32 %v123, 4294901760
  %v298 = vsub.f32 %v123, %v297
  %v299 = vand.u32 %v298, 4294901760
  %v300 = vsub.f32 %v298, %v299
  %v301 = vand.u32 %v300, 4294901760
  %302 = vmatpush1.msra.mxu0 %v301
  %303 = vmatprep.subr.mxu0 0.0
  %v304 = vand.u32 %v124, 4294901760
  %v305 = vsub.f32 %v124, %v304
  %v306 = vand.u32 %v305, 4294901760
  %v307 = vsub.f32 %v305, %v306
  %v308 = vand.u32 %v307, 4294901760
  %309 = vmatpush1.msra.mxu0 %v308
  %310 = vmatprep.subr.mxu0 0.0
  %v311 = vand.u32 %v125, 4294901760
  %v312 = vsub.f32 %v125, %v311
  %v313 = vand.u32 %v312, 4294901760
  %v314 = vsub.f32 %v312, %v313
  %v315 = vand.u32 %v314, 4294901760
  %316 = vmatpush1.msra.mxu0 %v315
  %317 = vmatprep.subr.mxu0 0.0
  %v318 = vand.u32 %v126, 4294901760
  %v319 = vsub.f32 %v126, %v318
  %v320 = vand.u32 %v319, 4294901760
  %v321 = vsub.f32 %v319, %v320
  %v322 = vand.u32 %v321, 4294901760
  %323 = vmatpush1.msra.mxu0 %v322
  %324 = vmatprep.subr.mxu0 0.0
  %v325 = vand.u32 %v127, 4294901760
  %v326 = vsub.f32 %v127, %v325
  %v327 = vand.u32 %v326, 4294901760
  %v328 = vsub.f32 %v326, %v327
  %v329 = vand.u32 %v328, 4294901760
  %330 = vmatpush1.msra.mxu0 %v329
  %331 = vmatprep.subr.mxu0 0.0
  %332 = vmatpush1.msra.mxu0 0.0
  %333 = vmatprep.subr.mxu0 0.0
  %334 = vmatpush1.msra.mxu0 0.0
  %335 = vmatprep.subr.mxu0 0.0
  %336 = vmatpush1.msra.mxu0 0.0
  %337 = vmatprep.subr.mxu0 0.0
  %338 = vmatpush1.msra.mxu0 0.0
  %339 = vmatprep.subr.mxu0 0.0
  %340 = vmatpush1.msra.mxu0 0.0
  %341 = vmatprep.subr.mxu0 0.0
  %342 = vmatpush1.msra.mxu0 0.0
  %343 = vmatprep.subr.mxu0 0.0
  %344 = vmatpush1.msra.mxu0 0.0
  %345 = vmatprep.subr.mxu0 0.0
  %346 = vmatpush1.msra.mxu0 0.0
  %347 = vmatprep.subr.mxu0 0.0
  %348 = vmatpush1.msra.mxu0 0.0
  %349 = vmatprep.subr.mxu0 0.0
  %350 = vmatpush1.msra.mxu0 0.0
  %351 = vmatprep.subr.mxu0 0.0
  %352 = vmatpush1.msra.mxu0 0.0
  %353 = vmatprep.subr.mxu0 0.0
  %354 = vmatpush1.msra.mxu0 0.0
  %355 = vmatprep.subr.mxu0 0.0
  %356 = vmatpush1.msra.mxu0 0.0
  %357 = vmatprep.subr.mxu0 0.0
  %358 = vmatpush1.msra.mxu0 0.0
  %359 = vmatprep.subr.mxu0 0.0
  %360 = vmatpush1.msra.mxu0 0.0
  %361 = vmatprep.subr.mxu0 0.0
  %362 = vmatpush1.msra.mxu0 0.0
  %363 = vmatprep.mubr.f32.mxu0 0.0
  %v364 = vand.u32 %v23, 4294901760
  %365 = vmatmul.mubr.f32.gmra.mrb[0].mxu0 %v364
  %v366 = vpop.f32.mrb[0].mxu0
  %v367 = vadd.f32 %v216, %v366
  %v368 = vpop.f32.mrb[0].mxu0
  %369 = vdwg.mxu0
  %370 = vmatprep.subr.mxu0 0.0
  %v371 = vand.u32 %v112, 4294901760
  %v372 = vsub.f32 %v112, %v371
  %373 = vmatpush1.msra.mxu0 %v372
  %374 = vmatprep.subr.mxu0 0.0
  %v375 = vand.u32 %v113, 4294901760
  %v376 = vsub.f32 %v113, %v375
  %377 = vmatpush1.msra.mxu0 %v376
  %378 = vmatprep.subr.mxu0 0.0
  %v379 = vand.u32 %v114, 4294901760
  %v380 = vsub.f32 %v114, %v379
  %381 = vmatpush1.msra.mxu0 %v380
  %382 = vmatprep.subr.mxu0 0.0
  %v383 = vand.u32 %v115, 4294901760
  %v384 = vsub.f32 %v115, %v383
  %385 = vmatpush1.msra.mxu0 %v384
  %386 = vmatprep.subr.mxu0 0.0
  %v387 = vand.u32 %v116, 4294901760
  %v388 = vsub.f32 %v116, %v387
  %389 = vmatpush1.msra.mxu0 %v388
  %390 = vmatprep.subr.mxu0 0.0
  %v391 = vand.u32 %v117, 4294901760
  %v392 = vsub.f32 %v117, %v391
  %393 = vmatpush1.msra.mxu0 %v392
  %394 = vmatprep.subr.mxu0 0.0
  %v395 = vand.u32 %v118, 4294901760
  %v396 = vsub.f32 %v118, %v395
  %397 = vmatpush1.msra.mxu0 %v396
  %398 = vmatprep.subr.mxu0 0.0
  %v399 = vand.u32 %v119, 4294901760
  %v400 = vsub.f32 %v119, %v399
  %401 = vmatpush1.msra.mxu0 %v400
  %402 = vmatprep.subr.mxu0 0.0
  %v403 = vand.u32 %v120, 4294901760
  %v404 = vsub.f32 %v120, %v403
  %405 = vmatpush1.msra.mxu0 %v404
  %406 = vmatprep.subr.mxu0 0.0
  %v407 = vand.u32 %v121, 4294901760
  %v408 = vsub.f32 %v121, %v407
  %409 = vmatpush1.msra.mxu0 %v408
  %410 = vmatprep.subr.mxu0 0.0
  %v411 = vand.u32 %v122, 4294901760
  %v412 = vsub.f32 %v122, %v411
  %413 = vmatpush1.msra.mxu0 %v412
  %414 = vmatprep.subr.mxu0 0.0
  %v415 = vand.u32 %v123, 4294901760
  %v416 = vsub.f32 %v123, %v415
  %417 = vmatpush1.msra.mxu0 %v416
  %418 = vmatprep.subr.mxu0 0.0
  %v419 = vand.u32 %v124, 4294901760
  %v420 = vsub.f32 %v124, %v419
  %421 = vmatpush1.msra.mxu0 %v420
  %422 = vmatprep.subr.mxu0 0.0
  %v423 = vand.u32 %v125, 4294901760
  %v424 = vsub.f32 %v125, %v423
  %425 = vmatpush1.msra.mxu0 %v424
  %426 = vmatprep.subr.mxu0 0.0
  %v427 = vand.u32 %v126, 4294901760
  %v428 = vsub.f32 %v126, %v427
  %429 = vmatpush1.msra.mxu0 %v428
  %430 = vmatprep.subr.mxu0 0.0
  %v431 = vand.u32 %v127, 4294901760
  %v432 = vsub.f32 %v127, %v431
  %433 = vmatpush1.msra.mxu0 %v432
  %434 = vmatprep.subr.mxu0 0.0
  %435 = vmatpush1.msra.mxu0 0.0
  %436 = vmatprep.subr.mxu0 0.0
  %437 = vmatpush1.msra.mxu0 0.0
  %438 = vmatprep.subr.mxu0 0.0
  %439 = vmatpush1.msra.mxu0 0.0
  %440 = vmatprep.subr.mxu0 0.0
  %441 = vmatpush1.msra.mxu0 0.0
  %442 = vmatprep.subr.mxu0 0.0
  %443 = vmatpush1.msra.mxu0 0.0
  %444 = vmatprep.subr.mxu0 0.0
  %445 = vmatpush1.msra.mxu0 0.0
  %446 = vmatprep.subr.mxu0 0.0
  %447 = vmatpush1.msra.mxu0 0.0
  %448 = vmatprep.subr.mxu0 0.0
  %449 = vmatpush1.msra.mxu0 0.0
  %450 = vmatprep.subr.mxu0 0.0
  %451 = vmatpush1.msra.mxu0 0.0
  %452 = vmatprep.subr.mxu0 0.0
  %453 = vmatpush1.msra.mxu0 0.0
  %454 = vmatprep.subr.mxu0 0.0
  %455 = vmatpush1.msra.mxu0 0.0
  %456 = vmatprep.subr.mxu0 0.0
  %457 = vmatpush1.msra.mxu0 0.0
  %458 = vmatprep.subr.mxu0 0.0
  %459 = vmatpush1.msra.mxu0 0.0
  %460 = vmatprep.subr.mxu0 0.0
  %461 = vmatpush1.msra.mxu0 0.0
  %462 = vmatprep.subr.mxu0 0.0
  %463 = vmatpush1.msra.mxu0 0.0
  %464 = vmatprep.subr.mxu0 0.0
  %465 = vmatpush1.msra.mxu0 0.0
  %466 = vmatprep.mubr.f32.mxu0 0.0
  %v467 = vand.u32 %v23, 4294901760
  %v468 = vsub.f32 %v23, %v467
  %469 = vmatmul.mubr.f32.gmra.mrb[0].mxu0 %v468
  %v470 = vpop.f32.mrb[0].mxu0
  %v471 = vadd.f32 %v367, %v470
  %v472 = vpop.f32.mrb[0].mxu0
  %473 = vdwg.mxu0
  %474 = vmatprep.subr.mxu0 0.0
  %v475 = vand.u32 %v112, 4294901760
  %476 = vmatpush1.msra.mxu0 %v475
  %477 = vmatprep.subr.mxu0 0.0
  %v478 = vand.u32 %v113, 4294901760
  %479 = vmatpush1.msra.mxu0 %v478
  %480 = vmatprep.subr.mxu0 0.0
  %v481 = vand.u32 %v114, 4294901760
  %482 = vmatpush1.msra.mxu0 %v481
  %483 = vmatprep.subr.mxu0 0.0
  %v484 = vand.u32 %v115, 4294901760
  %485 = vmatpush1.msra.mxu0 %v484
  %486 = vmatprep.subr.mxu0 0.0
  %v487 = vand.u32 %v116, 4294901760
  %488 = vmatpush1.msra.mxu0 %v487
  %489 = vmatprep.subr.mxu0 0.0
  %v490 = vand.u32 %v117, 4294901760
  %491 = vmatpush1.msra.mxu0 %v490
  %492 = vmatprep.subr.mxu0 0.0
  %v493 = vand.u32 %v118, 4294901760
  %494 = vmatpush1.msra.mxu0 %v493
  %495 = vmatprep.subr.mxu0 0.0
  %v496 = vand.u32 %v119, 4294901760
  %497 = vmatpush1.msra.mxu0 %v496
  %498 = vmatprep.subr.mxu0 0.0
  %v499 = vand.u32 %v120, 4294901760
  %500 = vmatpush1.msra.mxu0 %v499
  %501 = vmatprep.subr.mxu0 0.0
  %v502 = vand.u32 %v121, 4294901760
  %503 = vmatpush1.msra.mxu0 %v502
  %504 = vmatprep.subr.mxu0 0.0
  %v505 = vand.u32 %v122, 4294901760
  %506 = vmatpush1.msra.mxu0 %v505
  %507 = vmatprep.subr.mxu0 0.0
  %v508 = vand.u32 %v123, 4294901760
  %509 = vmatpush1.msra.mxu0 %v508
  %510 = vmatprep.subr.mxu0 0.0
  %v511 = vand.u32 %v124, 4294901760
  %512 = vmatpush1.msra.mxu0 %v511
  %513 = vmatprep.subr.mxu0 0.0
  %v514 = vand.u32 %v125, 4294901760
  %515 = vmatpush1.msra.mxu0 %v514
  %516 = vmatprep.subr.mxu0 0.0
  %v517 = vand.u32 %v126, 4294901760
  %518 = vmatpush1.msra.mxu0 %v517
  %519 = vmatprep.subr.mxu0 0.0
  %v520 = vand.u32 %v127, 4294901760
  %521 = vmatpush1.msra.mxu0 %v520
  %522 = vmatprep.subr.mxu0 0.0
  %523 = vmatpush1.msra.mxu0 0.0
  %524 = vmatprep.subr.mxu0 0.0
  %525 = vmatpush1.msra.mxu0 0.0
  %526 = vmatprep.subr.mxu0 0.0
  %527 = vmatpush1.msra.mxu0 0.0
  %528 = vmatprep.subr.mxu0 0.0
  %529 = vmatpush1.msra.mxu0 0.0
  %530 = vmatprep.subr.mxu0 0.0
  %531 = vmatpush1.msra.mxu0 0.0
  %532 = vmatprep.subr.mxu0 0.0
  %533 = vmatpush1.msra.mxu0 0.0
  %534 = vmatprep.subr.mxu0 0.0
  %535 = vmatpush1.msra.mxu0 0.0
  %536 = vmatprep.subr.mxu0 0.0
  %537 = vmatpush1.msra.mxu0 0.0
  %538 = vmatprep.subr.mxu0 0.0
  %539 = vmatpush1.msra.mxu0 0.0
  %540 = vmatprep.subr.mxu0 0.0
  %541 = vmatpush1.msra.mxu0 0.0
  %542 = vmatprep.subr.mxu0 0.0
  %543 = vmatpush1.msra.mxu0 0.0
  %544 = vmatprep.subr.mxu0 0.0
  %545 = vmatpush1.msra.mxu0 0.0
  %546 = vmatprep.subr.mxu0 0.0
  %547 = vmatpush1.msra.mxu0 0.0
  %548 = vmatprep.subr.mxu0 0.0
  %549 = vmatpush1.msra.mxu0 0.0
  %550 = vmatprep.subr.mxu0 0.0
  %551 = vmatpush1.msra.mxu0 0.0
  %552 = vmatprep.subr.mxu0 0.0
  %553 = vmatpush1.msra.mxu0 0.0
  %554 = vmatprep.mubr.f32.mxu0 0.0
  %v555 = vand.u32 %v23, 4294901760
  %v556 = vsub.f32 %v23, %v555
  %v557 = vand.u32 %v556, 4294901760
  %558 = vmatmul.mubr.f32.gmra.mrb[0].mxu0 %v557
  %v559 = vpop.f32.mrb[0].mxu0
  %v560 = vadd.f32 %v471, %v559
  %v561 = vpop.f32.mrb[0].mxu0
  %562 = vdwg.mxu0
  %563 = vmatprep.subr.mxu0 0.0
  %v564 = vand.u32 %v112, 4294901760
  %v565 = vsub.f32 %v112, %v564
  %v566 = vand.u32 %v565, 4294901760
  %567 = vmatpush1.msra.mxu0 %v566
  %568 = vmatprep.subr.mxu0 0.0
  %v569 = vand.u32 %v113, 4294901760
  %v570 = vsub.f32 %v113, %v569
  %v571 = vand.u32 %v570, 4294901760
  %572 = vmatpush1.msra.mxu0 %v571
  %573 = vmatprep.subr.mxu0 0.0
  %v574 = vand.u32 %v114, 4294901760
  %v575 = vsub.f32 %v114, %v574
  %v576 = vand.u32 %v575, 4294901760
  %577 = vmatpush1.msra.mxu0 %v576
  %578 = vmatprep.subr.mxu0 0.0
  %v579 = vand.u32 %v115, 4294901760
  %v580 = vsub.f32 %v115, %v579
  %v581 = vand.u32 %v580, 4294901760
  %582 = vmatpush1.msra.mxu0 %v581
  %583 = vmatprep.subr.mxu0 0.0
  %v584 = vand.u32 %v116, 4294901760
  %v585 = vsub.f32 %v116, %v584
  %v586 = vand.u32 %v585, 4294901760
  %587 = vmatpush1.msra.mxu0 %v586
  %588 = vmatprep.subr.mxu0 0.0
  %v589 = vand.u32 %v117, 4294901760
  %v590 = vsub.f32 %v117, %v589
  %v591 = vand.u32 %v590, 4294901760
  %592 = vmatpush1.msra.mxu0 %v591
  %593 = vmatprep.subr.mxu0 0.0
  %v594 = vand.u32 %v118, 4294901760
  %v595 = vsub.f32 %v118, %v594
  %v596 = vand.u32 %v595, 4294901760
  %597 = vmatpush1.msra.mxu0 %v596
  %598 = vmatprep.subr.mxu0 0.0
  %v599 = vand.u32 %v119, 4294901760
  %v600 = vsub.f32 %v119, %v599
  %v601 = vand.u32 %v600, 4294901760
  %602 = vmatpush1.msra.mxu0 %v601
  %603 = vmatprep.subr.mxu0 0.0
  %v604 = vand.u32 %v120, 4294901760
  %v605 = vsub.f32 %v120, %v604
  %v606 = vand.u32 %v605, 4294901760
  %607 = vmatpush1.msra.mxu0 %v606
  %608 = vmatprep.subr.mxu0 0.0
  %v609 = vand.u32 %v121, 4294901760
  %v610 = vsub.f32 %v121, %v609
  %v611 = vand.u32 %v610, 4294901760
  %612 = vmatpush1.msra.mxu0 %v611
  %613 = vmatprep.subr.mxu0 0.0
  %v614 = vand.u32 %v122, 4294901760
  %v615 = vsub.f32 %v122, %v614
  %v616 = vand.u32 %v615, 4294901760
  %617 = vmatpush1.msra.mxu0 %v616
  %618 = vmatprep.subr.mxu0 0.0
  %v619 = vand.u32 %v123, 4294901760
  %v620 = vsub.f32 %v123, %v619
  %v621 = vand.u32 %v620, 4294901760
  %622 = vmatpush1.msra.mxu0 %v621
  %623 = vmatprep.subr.mxu0 0.0
  %v624 = vand.u32 %v124, 4294901760
  %v625 = vsub.f32 %v124, %v624
  %v626 = vand.u32 %v625, 4294901760
  %627 = vmatpush1.msra.mxu0 %v626
  %628 = vmatprep.subr.mxu0 0.0
  %v629 = vand.u32 %v125, 4294901760
  %v630 = vsub.f32 %v125, %v629
  %v631 = vand.u32 %v630, 4294901760
  %632 = vmatpush1.msra.mxu0 %v631
  %633 = vmatprep.subr.mxu0 0.0
  %v634 = vand.u32 %v126, 4294901760
  %v635 = vsub.f32 %v126, %v634
  %v636 = vand.u32 %v635, 4294901760
  %637 = vmatpush1.msra.mxu0 %v636
  %638 = vmatprep.subr.mxu0 0.0
  %v639 = vand.u32 %v127, 4294901760
  %v640 = vsub.f32 %v127, %v639
  %v641 = vand.u32 %v640, 4294901760
  %642 = vmatpush1.msra.mxu0 %v641
  %643 = vmatprep.subr.mxu0 0.0
  %644 = vmatpush1.msra.mxu0 0.0
  %645 = vmatprep.subr.mxu0 0.0
  %646 = vmatpush1.msra.mxu0 0.0
  %647 = vmatprep.subr.mxu0 0.0
  %648 = vmatpush1.msra.mxu0 0.0
  %649 = vmatprep.subr.mxu0 0.0
  %650 = vmatpush1.msra.mxu0 0.0
  %651 = vmatprep.subr.mxu0 0.0
  %652 = vmatpush1.msra.mxu0 0.0
  %653 = vmatprep.subr.mxu0 0.0
  %654 = vmatpush1.msra.mxu0 0.0
  %655 = vmatprep.subr.mxu0 0.0
  %656 = vmatpush1.msra.mxu0 0.0
  %657 = vmatprep.subr.mxu0 0.0
  %658 = vmatpush1.msra.mxu0 0.0
  %659 = vmatprep.subr.mxu0 0.0
  %660 = vmatpush1.msra.mxu0 0.0
  %661 = vmatprep.subr.mxu0 0.0
  %662 = vmatpush1.msra.mxu0 0.0
  %663 = vmatprep.subr.mxu0 0.0
  %664 = vmatpush1.msra.mxu0 0.0
  %665 = vmatprep.subr.mxu0 0.0
  %666 = vmatpush1.msra.mxu0 0.0
  %667 = vmatprep.subr.mxu0 0.0
  %668 = vmatpush1.msra.mxu0 0.0
  %669 = vmatprep.subr.mxu0 0.0
  %670 = vmatpush1.msra.mxu0 0.0
  %671 = vmatprep.subr.mxu0 0.0
  %672 = vmatpush1.msra.mxu0 0.0
  %673 = vmatprep.subr.mxu0 0.0
  %674 = vmatpush1.msra.mxu0 0.0
  %675 = vmatprep.mubr.f32.mxu0 0.0
  %v676 = vand.u32 %v23, 4294901760
  %677 = vmatmul.mubr.f32.gmra.mrb[0].mxu0 %v676
  %v678 = vpop.f32.mrb[0].mxu0
  %v679 = vadd.f32 %v560, %v678
  %v680 = vpop.f32.mrb[0].mxu0
  %681 = vdwg.mxu0
  %682 = vmatprep.subr.mxu0 0.0
  %v683 = vand.u32 %v112, 4294901760
  %684 = vmatpush1.msra.mxu0 %v683
  %685 = vmatprep.subr.mxu0 0.0
  %v686 = vand.u32 %v113, 4294901760
  %687 = vmatpush1.msra.mxu0 %v686
  %688 = vmatprep.subr.mxu0 0.0
  %v689 = vand.u32 %v114, 4294901760
  %690 = vmatpush1.msra.mxu0 %v689
  %691 = vmatprep.subr.mxu0 0.0
  %v692 = vand.u32 %v115, 4294901760
  %693 = vmatpush1.msra.mxu0 %v692
  %694 = vmatprep.subr.mxu0 0.0
  %v695 = vand.u32 %v116, 4294901760
  %696 = vmatpush1.msra.mxu0 %v695
  %697 = vmatprep.subr.mxu0 0.0
  %v698 = vand.u32 %v117, 4294901760
  %699 = vmatpush1.msra.mxu0 %v698
  %700 = vmatprep.subr.mxu0 0.0
  %v701 = vand.u32 %v118, 4294901760
  %702 = vmatpush1.msra.mxu0 %v701
  %703 = vmatprep.subr.mxu0 0.0
  %v704 = vand.u32 %v119, 4294901760
  %705 = vmatpush1.msra.mxu0 %v704
  %706 = vmatprep.subr.mxu0 0.0
  %v707 = vand.u32 %v120, 4294901760
  %708 = vmatpush1.msra.mxu0 %v707
  %709 = vmatprep.subr.mxu0 0.0
  %v710 = vand.u32 %v121, 4294901760
  %711 = vmatpush1.msra.mxu0 %v710
  %712 = vmatprep.subr.mxu0 0.0
  %v713 = vand.u32 %v122, 4294901760
  %714 = vmatpush1.msra.mxu0 %v713
  %715 = vmatprep.subr.mxu0 0.0
  %v716 = vand.u32 %v123, 4294901760
  %717 = vmatpush1.msra.mxu0 %v716
  %718 = vmatprep.subr.mxu0 0.0
  %v719 = vand.u32 %v124, 4294901760
  %720 = vmatpush1.msra.mxu0 %v719
  %721 = vmatprep.subr.mxu0 0.0
  %v722 = vand.u32 %v125, 4294901760
  %723 = vmatpush1.msra.mxu0 %v722
  %724 = vmatprep.subr.mxu0 0.0
  %v725 = vand.u32 %v126, 4294901760
  %726 = vmatpush1.msra.mxu0 %v725
  %727 = vmatprep.subr.mxu0 0.0
  %v728 = vand.u32 %v127, 4294901760
  %729 = vmatpush1.msra.mxu0 %v728
  %730 = vmatprep.subr.mxu0 0.0
  %731 = vmatpush1.msra.mxu0 0.0
  %732 = vmatprep.subr.mxu0 0.0
  %733 = vmatpush1.msra.mxu0 0.0
  %734 = vmatprep.subr.mxu0 0.0
  %735 = vmatpush1.msra.mxu0 0.0
  %736 = vmatprep.subr.mxu0 0.0
  %737 = vmatpush1.msra.mxu0 0.0
  %738 = vmatprep.subr.mxu0 0.0
  %739 = vmatpush1.msra.mxu0 0.0
  %740 = vmatprep.subr.mxu0 0.0
  %741 = vmatpush1.msra.mxu0 0.0
  %742 = vmatprep.subr.mxu0 0.0
  %743 = vmatpush1.msra.mxu0 0.0
  %744 = vmatprep.subr.mxu0 0.0
  %745 = vmatpush1.msra.mxu0 0.0
  %746 = vmatprep.subr.mxu0 0.0
  %747 = vmatpush1.msra.mxu0 0.0
  %748 = vmatprep.subr.mxu0 0.0
  %749 = vmatpush1.msra.mxu0 0.0
  %750 = vmatprep.subr.mxu0 0.0
  %751 = vmatpush1.msra.mxu0 0.0
  %752 = vmatprep.subr.mxu0 0.0
  %753 = vmatpush1.msra.mxu0 0.0
  %754 = vmatprep.subr.mxu0 0.0
  %755 = vmatpush1.msra.mxu0 0.0
  %756 = vmatprep.subr.mxu0 0.0
  %757 = vmatpush1.msra.mxu0 0.0
  %758 = vmatprep.subr.mxu0 0.0
  %759 = vmatpush1.msra.mxu0 0.0
  %760 = vmatprep.subr.mxu0 0.0
  %761 = vmatpush1.msra.mxu0 0.0
  %762 = vmatprep.mubr.f32.mxu0 0.0
  %v763 = vand.u32 %v23, 4294901760
  %764 = vmatmul.mubr.f32.gmra.mrb[0].mxu0 %v763
  %v765 = vpop.f32.mrb[0].mxu0
  %v766 = vadd.f32 %v679, %v765
  %v767 = vpop.f32.mrb[0].mxu0
  %768 = vdwg.mxu0
  %769 = vmatprep.subr.mxu0 0.0
  %v770 = vand.u32 %v112, 4294901760
  %771 = vmatpush1.msra.mxu0 %v770
  %772 = vmatprep.subr.mxu0 0.0
  %v773 = vand.u32 %v113, 4294901760
  %774 = vmatpush1.msra.mxu0 %v773
  %775 = vmatprep.subr.mxu0 0.0
  %v776 = vand.u32 %v114, 4294901760
  %777 = vmatpush1.msra.mxu0 %v776
  %778 = vmatprep.subr.mxu0 0.0
  %v779 = vand.u32 %v115, 4294901760
  %780 = vmatpush1.msra.mxu0 %v779
  %781 = vmatprep.subr.mxu0 0.0
  %v782 = vand.u32 %v116, 4294901760
  %783 = vmatpush1.msra.mxu0 %v782
  %784 = vmatprep.subr.mxu0 0.0
  %v785 = vand.u32 %v117, 4294901760
  %786 = vmatpush1.msra.mxu0 %v785
  %787 = vmatprep.subr.mxu0 0.0
  %v788 = vand.u32 %v118, 4294901760
  %789 = vmatpush1.msra.mxu0 %v788
  %790 = vmatprep.subr.mxu0 0.0
  %v791 = vand.u32 %v119, 4294901760
  %792 = vmatpush1.msra.mxu0 %v791
  %793 = vmatprep.subr.mxu0 0.0
  %v794 = vand.u32 %v120, 4294901760
  %795 = vmatpush1.msra.mxu0 %v794
  %796 = vmatprep.subr.mxu0 0.0
  %v797 = vand.u32 %v121, 4294901760
  %798 = vmatpush1.msra.mxu0 %v797
  %799 = vmatprep.subr.mxu0 0.0
  %v800 = vand.u32 %v122, 4294901760
  %801 = vmatpush1.msra.mxu0 %v800
  %802 = vmatprep.subr.mxu0 0.0
  %v803 = vand.u32 %v123, 4294901760
  %804 = vmatpush1.msra.mxu0 %v803
  %805 = vmatprep.subr.mxu0 0.0
  %v806 = vand.u32 %v124, 4294901760
  %807 = vmatpush1.msra.mxu0 %v806
  %808 = vmatprep.subr.mxu0 0.0
  %v809 = vand.u32 %v125, 4294901760
  %810 = vmatpush1.msra.mxu0 %v809
  %811 = vmatprep.subr.mxu0 0.0
  %v812 = vand.u32 %v126, 4294901760
  %813 = vmatpush1.msra.mxu0 %v812
  %814 = vmatprep.subr.mxu0 0.0
  %v815 = vand.u32 %v127, 4294901760
  %816 = vmatpush1.msra.mxu0 %v815
  %817 = vmatprep.subr.mxu0 0.0
  %818 = vmatpush1.msra.mxu0 0.0
  %819 = vmatprep.subr.mxu0 0.0
  %820 = vmatpush1.msra.mxu0 0.0
  %821 = vmatprep.subr.mxu0 0.0
  %822 = vmatpush1.msra.mxu0 0.0
  %823 = vmatprep.subr.mxu0 0.0
  %824 = vmatpush1.msra.mxu0 0.0
  %825 = vmatprep.subr.mxu0 0.0
  %826 = vmatpush1.msra.mxu0 0.0
  %827 = vmatprep.subr.mxu0 0.0
  %828 = vmatpush1.msra.mxu0 0.0
  %829 = vmatprep.subr.mxu0 0.0
  %830 = vmatpush1.msra.mxu0 0.0
  %831 = vmatprep.subr.mxu0 0.0
  %832 = vmatpush1.msra.mxu0 0.0
  %833 = vmatprep.subr.mxu0 0.0
  %834 = vmatpush1.msra.mxu0 0.0
  %835 = vmatprep.subr.mxu0 0.0
  %836 = vmatpush1.msra.mxu0 0.0
  %837 = vmatprep.subr.mxu0 0.0
  %838 = vmatpush1.msra.mxu0 0.0
  %839 = vmatprep.subr.mxu0 0.0
  %840 = vmatpush1.msra.mxu0 0.0
  %841 = vmatprep.subr.mxu0 0.0
  %842 = vmatpush1.msra.mxu0 0.0
  %843 = vmatprep.subr.mxu0 0.0
  %844 = vmatpush1.msra.mxu0 0.0
  %845 = vmatprep.subr.mxu0 0.0
  %846 = vmatpush1.msra.mxu0 0.0
  %847 = vmatprep.subr.mxu0 0.0
  %848 = vmatpush1.msra.mxu0 0.0
  %849 = vmatprep.mubr.f32.mxu0 0.0
  %v850 = vand.u32 %v25, 4294901760
  %v851 = vsub.f32 %v25, %v850
  %v852 = vand.u32 %v851, 4294901760
  %v853 = vsub.f32 %v851, %v852
  %v854 = vand.u32 %v853, 4294901760
  %855 = vmatmul.mubr.f32.gmra.mrb[0].mxu0 %v854
  %v856 = vpop.f32.mrb[0].mxu0
  %v857 = vadd.f32 1.0, %v856
  %v858 = vpop.f32.mrb[0].mxu0
  %859 = vdwg.mxu0
  %860 = vmatprep.subr.mxu0 0.0
  %v861 = vand.u32 %v112, 4294901760
  %v862 = vsub.f32 %v112, %v861
  %v863 = vand.u32 %v862, 4294901760
  %v864 = vsub.f32 %v862, %v863
  %v865 = vand.u32 %v864, 4294901760
  %866 = vmatpush1.msra.mxu0 %v865
  %867 = vmatprep.subr.mxu0 0.0
  %v868 = vand.u32 %v113, 4294901760
  %v869 = vsub.f32 %v113, %v868
  %v870 = vand.u32 %v869, 4294901760
  %v871 = vsub.f32 %v869, %v870
  %v872 = vand.u32 %v871, 4294901760
  %873 = vmatpush1.msra.mxu0 %v872
  %874 = vmatprep.subr.mxu0 0.0
  %v875 = vand.u32 %v114, 4294901760
  %v876 = vsub.f32 %v114, %v875
  %v877 = vand.u32 %v876, 4294901760
  %v878 = vsub.f32 %v876, %v877
  %v879 = vand.u32 %v878, 4294901760
  %880 = vmatpush1.msra.mxu0 %v879
  %881 = vmatprep.subr.mxu0 0.0
  %v882 = vand.u32 %v115, 4294901760
  %v883 = vsub.f32 %v115, %v882
  %v884 = vand.u32 %v883, 4294901760
  %v885 = vsub.f32 %v883, %v884
  %v886 = vand.u32 %v885, 4294901760
  %887 = vmatpush1.msra.mxu0 %v886
  %888 = vmatprep.subr.mxu0 0.0
  %v889 = vand.u32 %v116, 4294901760
  %v890 = vsub.f32 %v116, %v889
  %v891 = vand.u32 %v890, 4294901760
  %v892 = vsub.f32 %v890, %v891
  %v893 = vand.u32 %v892, 4294901760
  %894 = vmatpush1.msra.mxu0 %v893
  %895 = vmatprep.subr.mxu0 0.0
  %v896 = vand.u32 %v117, 4294901760
  %v897 = vsub.f32 %v117, %v896
  %v898 = vand.u32 %v897, 4294901760
  %v899 = vsub.f32 %v897, %v898
  %v900 = vand.u32 %v899, 4294901760
  %901 = vmatpush1.msra.mxu0 %v900
  %902 = vmatprep.subr.mxu0 0.0
  %v903 = vand.u32 %v118, 4294901760
  %v904 = vsub.f32 %v118, %v903
  %v905 = vand.u32 %v904, 4294901760
  %v906 = vsub.f32 %v904, %v905
  %v907 = vand.u32 %v906, 4294901760
  %908 = vmatpush1.msra.mxu0 %v907
  %909 = vmatprep.subr.mxu0 0.0
  %v910 = vand.u32 %v119, 4294901760
  %v911 = vsub.f32 %v119, %v910
  %v912 = vand.u32 %v911, 4294901760
  %v913 = vsub.f32 %v911, %v912
  %v914 = vand.u32 %v913, 4294901760
  %915 = vmatpush1.msra.mxu0 %v914
  %916 = vmatprep.subr.mxu0 0.0
  %v917 = vand.u32 %v120, 4294901760
  %v918 = vsub.f32 %v120, %v917
  %v919 = vand.u32 %v918, 4294901760
  %v920 = vsub.f32 %v918, %v919
  %v921 = vand.u32 %v920, 4294901760
  %922 = vmatpush1.msra.mxu0 %v921
  %923 = vmatprep.subr.mxu0 0.0
  %v924 = vand.u32 %v121, 4294901760
  %v925 = vsub.f32 %v121, %v924
  %v926 = vand.u32 %v925, 4294901760
  %v927 = vsub.f32 %v925, %v926
  %v928 = vand.u32 %v927, 4294901760
  %929 = vmatpush1.msra.mxu0 %v928
  %930 = vmatprep.subr.mxu0 0.0
  %v931 = vand.u32 %v122, 4294901760
  %v932 = vsub.f32 %v122, %v931
  %v933 = vand.u32 %v932, 4294901760
  %v934 = vsub.f32 %v932, %v933
  %v935 = vand.u32 %v934, 4294901760
  %936 = vmatpush1.msra.mxu0 %v935
  %937 = vmatprep.subr.mxu0 0.0
  %v938 = vand.u32 %v123, 4294901760
  %v939 = vsub.f32 %v123, %v938
  %v940 = vand.u32 %v939, 4294901760
  %v941 = vsub.f32 %v939, %v940
  %v942 = vand.u32 %v941, 4294901760
  %943 = vmatpush1.msra.mxu0 %v942
  %944 = vmatprep.subr.mxu0 0.0
  %v945 = vand.u32 %v124, 4294901760
  %v946 = vsub.f32 %v124, %v945
  %v947 = vand.u32 %v946, 4294901760
  %v948 = vsub.f32 %v946, %v947
  %v949 = vand.u32 %v948, 4294901760
  %950 = vmatpush1.msra.mxu0 %v949
  %951 = vmatprep.subr.mxu0 0.0
  %v952 = vand.u32 %v125, 4294901760
  %v953 = vsub.f32 %v125, %v952
  %v954 = vand.u32 %v953, 4294901760
  %v955 = vsub.f32 %v953, %v954
  %v956 = vand.u32 %v955, 4294901760
  %957 = vmatpush1.msra.mxu0 %v956
  %958 = vmatprep.subr.mxu0 0.0
  %v959 = vand.u32 %v126, 4294901760
  %v960 = vsub.f32 %v126, %v959
  %v961 = vand.u32 %v960, 4294901760
  %v962 = vsub.f32 %v960, %v961
  %v963 = vand.u32 %v962, 4294901760
  %964 = vmatpush1.msra.mxu0 %v963
  %965 = vmatprep.subr.mxu0 0.0
  %v966 = vand.u32 %v127, 4294901760
  %v967 = vsub.f32 %v127, %v966
  %v968 = vand.u32 %v967, 4294901760
  %v969 = vsub.f32 %v967, %v968
  %v970 = vand.u32 %v969, 4294901760
  %971 = vmatpush1.msra.mxu0 %v970
  %972 = vmatprep.subr.mxu0 0.0
  %973 = vmatpush1.msra.mxu0 0.0
  %974 = vmatprep.subr.mxu0 0.0
  %975 = vmatpush1.msra.mxu0 0.0
  %976 = vmatprep.subr.mxu0 0.0
  %977 = vmatpush1.msra.mxu0 0.0
  %978 = vmatprep.subr.mxu0 0.0
  %979 = vmatpush1.msra.mxu0 0.0
  %980 = vmatprep.subr.mxu0 0.0
  %981 = vmatpush1.msra.mxu0 0.0
  %982 = vmatprep.subr.mxu0 0.0
  %983 = vmatpush1.msra.mxu0 0.0
  %984 = vmatprep.subr.mxu0 0.0
  %985 = vmatpush1.msra.mxu0 0.0
  %986 = vmatprep.subr.mxu0 0.0
  %987 = vmatpush1.msra.mxu0 0.0
  %988 = vmatprep.subr.mxu0 0.0
  %989 = vmatpush1.msra.mxu0 0.0
  %990 = vmatprep.subr.mxu0 0.0
  %991 = vmatpush1.msra.mxu0 0.0
  %992 = vmatprep.subr.mxu0 0.0
  %993 = vmatpush1.msra.mxu0 0.0
  %994 = vmatprep.subr.mxu0 0.0
  %995 = vmatpush1.msra.mxu0 0.0
  %996 = vmatprep.subr.mxu0 0.0
  %997 = vmatpush1.msra.mxu0 0.0
  %998 = vmatprep.subr.mxu0 0.0
  %999 = vmatpush1.msra.mxu0 0.0
  %1000 = vmatprep.subr.mxu0 0.0
  %1001 = vmatpush1.msra.mxu0 0.0
  %1002 = vmatprep.subr.mxu0 0.0
  %1003 = vmatpush1.msra.mxu0 0.0
  %1004 = vmatprep.mubr.f32.mxu0 0.0
  %v1005 = vand.u32 %v25, 4294901760
  %1006 = vmatmul.mubr.f32.gmra.mrb[0].mxu0 %v1005
  %v1007 = vpop.f32.mrb[0].mxu0
  %v1008 = vadd.f32 %v857, %v1007
  %v1009 = vpop.f32.mrb[0].mxu0
  %1010 = vdwg.mxu0
  %1011 = vmatprep.subr.mxu0 0.0
  %v1012 = vand.u32 %v112, 4294901760
  %v1013 = vsub.f32 %v112, %v1012
  %1014 = vmatpush1.msra.mxu0 %v1013
  %1015 = vmatprep.subr.mxu0 0.0
  %v1016 = vand.u32 %v113, 4294901760
  %v1017 = vsub.f32 %v113, %v1016
  %1018 = vmatpush1.msra.mxu0 %v1017
  %1019 = vmatprep.subr.mxu0 0.0
  %v1020 = vand.u32 %v114, 4294901760
  %v1021 = vsub.f32 %v114, %v1020
  %1022 = vmatpush1.msra.mxu0 %v1021
  %1023 = vmatprep.subr.mxu0 0.0
  %v1024 = vand.u32 %v115, 4294901760
  %v1025 = vsub.f32 %v115, %v1024
  %1026 = vmatpush1.msra.mxu0 %v1025
  %1027 = vmatprep.subr.mxu0 0.0
  %v1028 = vand.u32 %v116, 4294901760
  %v1029 = vsub.f32 %v116, %v1028
  %1030 = vmatpush1.msra.mxu0 %v1029
  %1031 = vmatprep.subr.mxu0 0.0
  %v1032 = vand.u32 %v117, 4294901760
  %v1033 = vsub.f32 %v117, %v1032
  %1034 = vmatpush1.msra.mxu0 %v1033
  %1035 = vmatprep.subr.mxu0 0.0
  %v1036 = vand.u32 %v118, 4294901760
  %v1037 = vsub.f32 %v118, %v1036
  %1038 = vmatpush1.msra.mxu0 %v1037
  %1039 = vmatprep.subr.mxu0 0.0
  %v1040 = vand.u32 %v119, 4294901760
  %v1041 = vsub.f32 %v119, %v1040
  %1042 = vmatpush1.msra.mxu0 %v1041
  %1043 = vmatprep.subr.mxu0 0.0
  %v1044 = vand.u32 %v120, 4294901760
  %v1045 = vsub.f32 %v120, %v1044
  %1046 = vmatpush1.msra.mxu0 %v1045
  %1047 = vmatprep.subr.mxu0 0.0
  %v1048 = vand.u32 %v121, 4294901760
  %v1049 = vsub.f32 %v121, %v1048
  %1050 = vmatpush1.msra.mxu0 %v1049
  %1051 = vmatprep.subr.mxu0 0.0
  %v1052 = vand.u32 %v122, 4294901760
  %v1053 = vsub.f32 %v122, %v1052
  %1054 = vmatpush1.msra.mxu0 %v1053
  %1055 = vmatprep.subr.mxu0 0.0
  %v1056 = vand.u32 %v123, 4294901760
  %v1057 = vsub.f32 %v123, %v1056
  %1058 = vmatpush1.msra.mxu0 %v1057
  %1059 = vmatprep.subr.mxu0 0.0
  %v1060 = vand.u32 %v124, 4294901760
  %v1061 = vsub.f32 %v124, %v1060
  %1062 = vmatpush1.msra.mxu0 %v1061
  %1063 = vmatprep.subr.mxu0 0.0
  %v1064 = vand.u32 %v125, 4294901760
  %v1065 = vsub.f32 %v125, %v1064
  %1066 = vmatpush1.msra.mxu0 %v1065
  %1067 = vmatprep.subr.mxu0 0.0
  %v1068 = vand.u32 %v126, 4294901760
  %v1069 = vsub.f32 %v126, %v1068
  %1070 = vmatpush1.msra.mxu0 %v1069
  %1071 = vmatprep.subr.mxu0 0.0
  %v1072 = vand.u32 %v127, 4294901760
  %v1073 = vsub.f32 %v127, %v1072
  %1074 = vmatpush1.msra.mxu0 %v1073
  %1075 = vmatprep.subr.mxu0 0.0
  %1076 = vmatpush1.msra.mxu0 0.0
  %1077 = vmatprep.subr.mxu0 0.0
  %1078 = vmatpush1.msra.mxu0 0.0
  %1079 = vmatprep.subr.mxu0 0.0
  %1080 = vmatpush1.msra.mxu0 0.0
  %1081 = vmatprep.subr.mxu0 0.0
  %1082 = vmatpush1.msra.mxu0 0.0
  %1083 = vmatprep.subr.mxu0 0.0
  %1084 = vmatpush1.msra.mxu0 0.0
  %1085 = vmatprep.subr.mxu0 0.0
  %1086 = vmatpush1.msra.mxu0 0.0
  %1087 = vmatprep.subr.mxu0 0.0
  %1088 = vmatpush1.msra.mxu0 0.0
  %1089 = vmatprep.subr.mxu0 0.0
  %1090 = vmatpush1.msra.mxu0 0.0
  %1091 = vmatprep.subr.mxu0 0.0
  %1092 = vmatpush1.msra.mxu0 0.0
  %1093 = vmatprep.subr.mxu0 0.0
  %1094 = vmatpush1.msra.mxu0 0.0
  %1095 = vmatprep.subr.mxu0 0.0
  %1096 = vmatpush1.msra.mxu0 0.0
  %1097 = vmatprep.subr.mxu0 0.0
  %1098 = vmatpush1.msra.mxu0 0.0
  %1099 = vmatprep.subr.mxu0 0.0
  %1100 = vmatpush1.msra.mxu0 0.0
  %1101 = vmatprep.subr.mxu0 0.0
  %1102 = vmatpush1.msra.mxu0 0.0
  %1103 = vmatprep.subr.mxu0 0.0
  %1104 = vmatpush1.msra.mxu0 0.0
  %1105 = vmatprep.subr.mxu0 0.0
  %1106 = vmatpush1.msra.mxu0 0.0
  %1107 = vmatprep.mubr.f32.mxu0 0.0
  %v1108 = vand.u32 %v25, 4294901760
  %v1109 = vsub.f32 %v25, %v1108
  %1110 = vmatmul.mubr.f32.gmra.mrb[0].mxu0 %v1109
  %v1111 = vpop.f32.mrb[0].mxu0
  %v1112 = vadd.f32 %v1008, %v1111
  %v1113 = vpop.f32.mrb[0].mxu0
  %1114 = vdwg.mxu0
  %1115 = vmatprep.subr.mxu0 0.0
  %v1116 = vand.u32 %v112, 4294901760
  %1117 = vmatpush1.msra.mxu0 %v1116
  %1118 = vmatprep.subr.mxu0 0.0
  %v1119 = vand.u32 %v113, 4294901760
  %1120 = vmatpush1.msra.mxu0 %v1119
  %1121 = vmatprep.subr.mxu0 0.0
  %v1122 = vand.u32 %v114, 4294901760
  %1123 = vmatpush1.msra.mxu0 %v1122
  %1124 = vmatprep.subr.mxu0 0.0
  %v1125 = vand.u32 %v115, 4294901760
  %1126 = vmatpush1.msra.mxu0 %v1125
  %1127 = vmatprep.subr.mxu0 0.0
  %v1128 = vand.u32 %v116, 4294901760
  %1129 = vmatpush1.msra.mxu0 %v1128
  %1130 = vmatprep.subr.mxu0 0.0
  %v1131 = vand.u32 %v117, 4294901760
  %1132 = vmatpush1.msra.mxu0 %v1131
  %1133 = vmatprep.subr.mxu0 0.0
  %v1134 = vand.u32 %v118, 4294901760
  %1135 = vmatpush1.msra.mxu0 %v1134
  %1136 = vmatprep.subr.mxu0 0.0
  %v1137 = vand.u32 %v119, 4294901760
  %1138 = vmatpush1.msra.mxu0 %v1137
  %1139 = vmatprep.subr.mxu0 0.0
  %v1140 = vand.u32 %v120, 4294901760
  %1141 = vmatpush1.msra.mxu0 %v1140
  %1142 = vmatprep.subr.mxu0 0.0
  %v1143 = vand.u32 %v121, 4294901760
  %1144 = vmatpush1.msra.mxu0 %v1143
  %1145 = vmatprep.subr.mxu0 0.0
  %v1146 = vand.u32 %v122, 4294901760
  %1147 = vmatpush1.msra.mxu0 %v1146
  %1148 = vmatprep.subr.mxu0 0.0
  %v1149 = vand.u32 %v123, 4294901760
  %1150 = vmatpush1.msra.mxu0 %v1149
  %1151 = vmatprep.subr.mxu0 0.0
  %v1152 = vand.u32 %v124, 4294901760
  %1153 = vmatpush1.msra.mxu0 %v1152
  %1154 = vmatprep.subr.mxu0 0.0
  %v1155 = vand.u32 %v125, 4294901760
  %1156 = vmatpush1.msra.mxu0 %v1155
  %1157 = vmatprep.subr.mxu0 0.0
  %v1158 = vand.u32 %v126, 4294901760
  %1159 = vmatpush1.msra.mxu0 %v1158
  %1160 = vmatprep.subr.mxu0 0.0
  %v1161 = vand.u32 %v127, 4294901760
  %1162 = vmatpush1.msra.mxu0 %v1161
  %1163 = vmatprep.subr.mxu0 0.0
  %1164 = vmatpush1.msra.mxu0 0.0
  %1165 = vmatprep.subr.mxu0 0.0
  %1166 = vmatpush1.msra.mxu0 0.0
  %1167 = vmatprep.subr.mxu0 0.0
  %1168 = vmatpush1.msra.mxu0 0.0
  %1169 = vmatprep.subr.mxu0 0.0
  %1170 = vmatpush1.msra.mxu0 0.0
  %1171 = vmatprep.subr.mxu0 0.0
  %1172 = vmatpush1.msra.mxu0 0.0
  %1173 = vmatprep.subr.mxu0 0.0
  %1174 = vmatpush1.msra.mxu0 0.0
  %1175 = vmatprep.subr.mxu0 0.0
  %1176 = vmatpush1.msra.mxu0 0.0
  %1177 = vmatprep.subr.mxu0 0.0
  %1178 = vmatpush1.msra.mxu0 0.0
  %1179 = vmatprep.subr.mxu0 0.0
  %1180 = vmatpush1.msra.mxu0 0.0
  %1181 = vmatprep.subr.mxu0 0.0
  %1182 = vmatpush1.msra.mxu0 0.0
  %1183 = vmatprep.subr.mxu0 0.0
  %1184 = vmatpush1.msra.mxu0 0.0
  %1185 = vmatprep.subr.mxu0 0.0
  %1186 = vmatpush1.msra.mxu0 0.0
  %1187 = vmatprep.subr.mxu0 0.0
  %1188 = vmatpush1.msra.mxu0 0.0
  %1189 = vmatprep.subr.mxu0 0.0
  %1190 = vmatpush1.msra.mxu0 0.0
  %1191 = vmatprep.subr.mxu0 0.0
  %1192 = vmatpush1.msra.mxu0 0.0
  %1193 = vmatprep.subr.mxu0 0.0
  %1194 = vmatpush1.msra.mxu0 0.0
  %1195 = vmatprep.mubr.f32.mxu0 0.0
  %v1196 = vand.u32 %v25, 4294901760
  %v1197 = vsub.f32 %v25, %v1196
  %v1198 = vand.u32 %v1197, 4294901760
  %1199 = vmatmul.mubr.f32.gmra.mrb[0].mxu0 %v1198
  %v1200 = vpop.f32.mrb[0].mxu0
  %v1201 = vadd.f32 %v1112, %v1200
  %v1202 = vpop.f32.mrb[0].mxu0
  %1203 = vdwg.mxu0
  %1204 = vmatprep.subr.mxu0 0.0
  %v1205 = vand.u32 %v112, 4294901760
  %v1206 = vsub.f32 %v112, %v1205
  %v1207 = vand.u32 %v1206, 4294901760
  %1208 = vmatpush1.msra.mxu0 %v1207
  %1209 = vmatprep.subr.mxu0 0.0
  %v1210 = vand.u32 %v113, 4294901760
  %v1211 = vsub.f32 %v113, %v1210
  %v1212 = vand.u32 %v1211, 4294901760
  %1213 = vmatpush1.msra.mxu0 %v1212
  %1214 = vmatprep.subr.mxu0 0.0
  %v1215 = vand.u32 %v114, 4294901760
  %v1216 = vsub.f32 %v114, %v1215
  %v1217 = vand.u32 %v1216, 4294901760
  %1218 = vmatpush1.msra.mxu0 %v1217
  %1219 = vmatprep.subr.mxu0 0.0
  %v1220 = vand.u32 %v115, 4294901760
  %v1221 = vsub.f32 %v115, %v1220
  %v1222 = vand.u32 %v1221, 4294901760
  %1223 = vmatpush1.msra.mxu0 %v1222
  %1224 = vmatprep.subr.mxu0 0.0
  %v1225 = vand.u32 %v116, 4294901760
  %v1226 = vsub.f32 %v116, %v1225
  %v1227 = vand.u32 %v1226, 4294901760
  %1228 = vmatpush1.msra.mxu0 %v1227
  %1229 = vmatprep.subr.mxu0 0.0
  %v1230 = vand.u32 %v117, 4294901760
  %v1231 = vsub.f32 %v117, %v1230
  %v1232 = vand.u32 %v1231, 4294901760
  %1233 = vmatpush1.msra.mxu0 %v1232
  %1234 = vmatprep.subr.mxu0 0.0
  %v1235 = vand.u32 %v118, 4294901760
  %v1236 = vsub.f32 %v118, %v1235
  %v1237 = vand.u32 %v1236, 4294901760
  %1238 = vmatpush1.msra.mxu0 %v1237
  %1239 = vmatprep.subr.mxu0 0.0
  %v1240 = vand.u32 %v119, 4294901760
  %v1241 = vsub.f32 %v119, %v1240
  %v1242 = vand.u32 %v1241, 4294901760
  %1243 = vmatpush1.msra.mxu0 %v1242
  %1244 = vmatprep.subr.mxu0 0.0
  %v1245 = vand.u32 %v120, 4294901760
  %v1246 = vsub.f32 %v120, %v1245
  %v1247 = vand.u32 %v1246, 4294901760
  %1248 = vmatpush1.msra.mxu0 %v1247
  %1249 = vmatprep.subr.mxu0 0.0
  %v1250 = vand.u32 %v121, 4294901760
  %v1251 = vsub.f32 %v121, %v1250
  %v1252 = vand.u32 %v1251, 4294901760
  %1253 = vmatpush1.msra.mxu0 %v1252
  %1254 = vmatprep.subr.mxu0 0.0
  %v1255 = vand.u32 %v122, 4294901760
  %v1256 = vsub.f32 %v122, %v1255
  %v1257 = vand.u32 %v1256, 4294901760
  %1258 = vmatpush1.msra.mxu0 %v1257
  %1259 = vmatprep.subr.mxu0 0.0
  %v1260 = vand.u32 %v123, 4294901760
  %v1261 = vsub.f32 %v123, %v1260
  %v1262 = vand.u32 %v1261, 4294901760
  %1263 = vmatpush1.msra.mxu0 %v1262
  %1264 = vmatprep.subr.mxu0 0.0
  %v1265 = vand.u32 %v124, 4294901760
  %v1266 = vsub.f32 %v124, %v1265
  %v1267 = vand.u32 %v1266, 4294901760
  %1268 = vmatpush1.msra.mxu0 %v1267
  %1269 = vmatprep.subr.mxu0 0.0
  %v1270 = vand.u32 %v125, 4294901760
  %v1271 = vsub.f32 %v125, %v1270
  %v1272 = vand.u32 %v1271, 4294901760
  %1273 = vmatpush1.msra.mxu0 %v1272
  %1274 = vmatprep.subr.mxu0 0.0
  %v1275 = vand.u32 %v126, 4294901760
  %v1276 = vsub.f32 %v126, %v1275
  %v1277 = vand.u32 %v1276, 4294901760
  %1278 = vmatpush1.msra.mxu0 %v1277
  %1279 = vmatprep.subr.mxu0 0.0
  %v1280 = vand.u32 %v127, 4294901760
  %v1281 = vsub.f32 %v127, %v1280
  %v1282 = vand.u32 %v1281, 4294901760
  %1283 = vmatpush1.msra.mxu0 %v1282
  %1284 = vmatprep.subr.mxu0 0.0
  %1285 = vmatpush1.msra.mxu0 0.0
  %1286 = vmatprep.subr.mxu0 0.0
  %1287 = vmatpush1.msra.mxu0 0.0
  %1288 = vmatprep.subr.mxu0 0.0
  %1289 = vmatpush1.msra.mxu0 0.0
  %1290 = vmatprep.subr.mxu0 0.0
  %1291 = vmatpush1.msra.mxu0 0.0
  %1292 = vmatprep.subr.mxu0 0.0
  %1293 = vmatpush1.msra.mxu0 0.0
  %1294 = vmatprep.subr.mxu0 0.0
  %1295 = vmatpush1.msra.mxu0 0.0
  %1296 = vmatprep.subr.mxu0 0.0
  %1297 = vmatpush1.msra.mxu0 0.0
  %1298 = vmatprep.subr.mxu0 0.0
  %1299 = vmatpush1.msra.mxu0 0.0
  %1300 = vmatprep.subr.mxu0 0.0
  %1301 = vmatpush1.msra.mxu0 0.0
  %1302 = vmatprep.subr.mxu0 0.0
  %1303 = vmatpush1.msra.mxu0 0.0
  %1304 = vmatprep.subr.mxu0 0.0
  %1305 = vmatpush1.msra.mxu0 0.0
  %1306 = vmatprep.subr.mxu0 0.0
  %1307 = vmatpush1.msra.mxu0 0.0
  %1308 = vmatprep.subr.mxu0 0.0
  %1309 = vmatpush1.msra.mxu0 0.0
  %1310 = vmatprep.subr.mxu0 0.0
  %1311 = vmatpush1.msra.mxu0 0.0
  %1312 = vmatprep.subr.mxu0 0.0
  %1313 = vmatpush1.msra.mxu0 0.0
  %1314 = vmatprep.subr.mxu0 0.0
  %1315 = vmatpush1.msra.mxu0 0.0
  %1316 = vmatprep.mubr.f32.mxu0 0.0
  %v1317 = vand.u32 %v25, 4294901760
  %1318 = vmatmul.mubr.f32.gmra.mrb[0].mxu0 %v1317
  %v1319 = vpop.f32.mrb[0].mxu0
  %v1320 = vadd.f32 %v1201, %v1319
  %v1321 = vpop.f32.mrb[0].mxu0
  %1322 = vdwg.mxu0
  %1323 = vmatprep.subr.mxu0 0.0
  %v1324 = vand.u32 %v112, 4294901760
  %1325 = vmatpush1.msra.mxu0 %v1324
  %1326 = vmatprep.subr.mxu0 0.0
  %v1327 = vand.u32 %v113, 4294901760
  %1328 = vmatpush1.msra.mxu0 %v1327
  %1329 = vmatprep.subr.mxu0 0.0
  %v1330 = vand.u32 %v114, 4294901760
  %1331 = vmatpush1.msra.mxu0 %v1330
  %1332 = vmatprep.subr.mxu0 0.0
  %v1333 = vand.u32 %v115, 4294901760
  %1334 = vmatpush1.msra.mxu0 %v1333
  %1335 = vmatprep.subr.mxu0 0.0
  %v1336 = vand.u32 %v116, 4294901760
  %1337 = vmatpush1.msra.mxu0 %v1336
  %1338 = vmatprep.subr.mxu0 0.0
  %v1339 = vand.u32 %v117, 4294901760
  %1340 = vmatpush1.msra.mxu0 %v1339
  %1341 = vmatprep.subr.mxu0 0.0
  %v1342 = vand.u32 %v118, 4294901760
  %1343 = vmatpush1.msra.mxu0 %v1342
  %1344 = vmatprep.subr.mxu0 0.0
  %v1345 = vand.u32 %v119, 4294901760
  %1346 = vmatpush1.msra.mxu0 %v1345
  %1347 = vmatprep.subr.mxu0 0.0
  %v1348 = vand.u32 %v120, 4294901760
  %1349 = vmatpush1.msra.mxu0 %v1348
  %1350 = vmatprep.subr.mxu0 0.0
  %v1351 = vand.u32 %v121, 4294901760
  %1352 = vmatpush1.msra.mxu0 %v1351
  %1353 = vmatprep.subr.mxu0 0.0
  %v1354 = vand.u32 %v122, 4294901760
  %1355 = vmatpush1.msra.mxu0 %v1354
  %1356 = vmatprep.subr.mxu0 0.0
  %v1357 = vand.u32 %v123, 4294901760
  %1358 = vmatpush1.msra.mxu0 %v1357
  %1359 = vmatprep.subr.mxu0 0.0
  %v1360 = vand.u32 %v124, 4294901760
  %1361 = vmatpush1.msra.mxu0 %v1360
  %1362 = vmatprep.subr.mxu0 0.0
  %v1363 = vand.u32 %v125, 4294901760
  %1364 = vmatpush1.msra.mxu0 %v1363
  %1365 = vmatprep.subr.mxu0 0.0
  %v1366 = vand.u32 %v126, 4294901760
  %1367 = vmatpush1.msra.mxu0 %v1366
  %1368 = vmatprep.subr.mxu0 0.0
  %v1369 = vand.u32 %v127, 4294901760
  %1370 = vmatpush1.msra.mxu0 %v1369
  %1371 = vmatprep.subr.mxu0 0.0
  %1372 = vmatpush1.msra.mxu0 0.0
  %1373 = vmatprep.subr.mxu0 0.0
  %1374 = vmatpush1.msra.mxu0 0.0
  %1375 = vmatprep.subr.mxu0 0.0
  %1376 = vmatpush1.msra.mxu0 0.0
  %1377 = vmatprep.subr.mxu0 0.0
  %1378 = vmatpush1.msra.mxu0 0.0
  %1379 = vmatprep.subr.mxu0 0.0
  %1380 = vmatpush1.msra.mxu0 0.0
  %1381 = vmatprep.subr.mxu0 0.0
  %1382 = vmatpush1.msra.mxu0 0.0
  %1383 = vmatprep.subr.mxu0 0.0
  %1384 = vmatpush1.msra.mxu0 0.0
  %1385 = vmatprep.subr.mxu0 0.0
  %1386 = vmatpush1.msra.mxu0 0.0
  %1387 = vmatprep.subr.mxu0 0.0
  %1388 = vmatpush1.msra.mxu0 0.0
  %1389 = vmatprep.subr.mxu0 0.0
  %1390 = vmatpush1.msra.mxu0 0.0
  %1391 = vmatprep.subr.mxu0 0.0
  %1392 = vmatpush1.msra.mxu0 0.0
  %1393 = vmatprep.subr.mxu0 0.0
  %1394 = vmatpush1.msra.mxu0 0.0
  %1395 = vmatprep.subr.mxu0 0.0
  %1396 = vmatpush1.msra.mxu0 0.0
  %1397 = vmatprep.subr.mxu0 0.0
  %1398 = vmatpush1.msra.mxu0 0.0
  %1399 = vmatprep.subr.mxu0 0.0
  %1400 = vmatpush1.msra.mxu0 0.0
  %1401 = vmatprep.subr.mxu0 0.0
  %1402 = vmatpush1.msra.mxu0 0.0
  %1403 = vmatprep.mubr.f32.mxu0 0.0
  %v1404 = vand.u32 %v25, 4294901760
  %1405 = vmatmul.mubr.f32.gmra.mrb[0].mxu0 %v1404
  %v1406 = vpop.f32.mrb[0].mxu0
  %v1407 = vadd.f32 %v1320, %v1406
  %v1408 = vpop.f32.mrb[0].mxu0
  %1409 = vdwg.mxu0
  %vm1410 = vcmp.gt.f32.partialorder %v766, %v1407
  %v1411 = vsel %vm1410, 1, 0
  %v1412 = vcvt.s32.f32 %v1411
  %v1413 = vadd.f32 %v766, %v1407
  %v1414 = vrcp.pop %v1413
  %v1415 = vmul.f32 %v766, %v1414
  %v1416 = vld [vmem:[%s3] sm:$0xff]
  %v1417 = vmul.f32 %v1416, %v1415
  %vm1418 = vcmask 130048
  %v1419 = vsel %vm1418, %v1417, 0.0
  %v1420 = vrot.slane %v1419, 4
  %v1421 = vadd.f32 %v1419, %v1420
  %v1422 = vrot.slane %v1421, 2
  %v1423 = vadd.f32 %v1421, %v1422
  %v1424 = vrot.slane %v1423, 1
  %v1425 = vadd.f32 %v1423, %v1424
  %vm1426 = vcmask 122880
  %1427 = vst.msk [vmem:[%s4] sm:$0x1] %vm1426, %v1425
  %v1428 = vsel %vm1418, %v1412, 0.0
  %v1429 = vrot.slane %v1428, 4
  %v1430 = vadd.f32 %v1428, %v1429
  %v1431 = vrot.slane %v1430, 2
  %v1432 = vadd.f32 %v1430, %v1431
  %v1433 = vrot.slane %v1432, 1
  %v1434 = vadd.f32 %v1432, %v1433
  %1435 = vst.msk [vmem:[%s5] sm:$0x1] %vm1426, %v1434
  // Predicated region
  $region18: #{trimapper_forward.1} parent=0 // pred_check
    _
  $region19: #{trimapper_forward.1} parent=0 // pred_check_branch
    %1437 = sbr.rel (0) target = $region21
  $region20: #{trimapper_forward.1} parent=0 // pred_region
    _
  $region21: #{trimapper_forward.1} parent=0 // pred_fallthru
    _
  // Predicated region
  $region22: #{trimapper_forward.1} parent=0 // pred_check
    _
  $region23: #{trimapper_forward.1} parent=0 // pred_check_branch
    %1439 = sbr.rel (0) target = $region25
  $region24: #{trimapper_forward.1} parent=0 // pred_region
    _
  $region25: #{trimapper_forward.1} parent=0 // pred_fallthru
    _
  // Predicated region
  $region26: #{trimapper_forward.1} parent=0 // pred_check
    _
  $region27: #{trimapper_forward.1} parent=0 // pred_check_branch
    %1441 = sbr.rel (0) target = $region29
  $region28: #{trimapper_forward.1} parent=0 // pred_region
    _
  $region29: #{trimapper_forward.1} parent=0 // pred_fallthru
    _
  // Predicated region
  $region30: #{trimapper_forward.1} parent=0 // pred_check
    _
  $region31: #{trimapper_forward.1} parent=0 // pred_check_branch
    %1443 = sbr.rel (0) target = $region33
  $region32: #{trimapper_forward.1} parent=0 // pred_region
    _
  $region33: #{trimapper_forward.1} parent=0 // pred_fallthru
    _

</llo_original>
